<compile_context>
chip_gen: v5e
topology: v5e:2x2
jax: 0.10.0
libtpu: 0.0.40
codegen_flags: <defaults>
</compile_context>

<pallas_src>
import math
from functools import partial

import jax
import jax.numpy as jnp
from jax import lax
from jax.experimental import pallas as pl
from jax.experimental.pallas import tpu as pltpu


def _round_up(x, m):
    return ((x + m - 1) // m) * m


def default(val, d):
    return val if val is not None else d


# ---------------------------------------------------------------------------
# Fused Pallas kernel: one lane-dense matmul pass over all branches.
# refs = (patches_0..patches_{nb-1}, w_0..w_{nb-1}, bias, out)
# ---------------------------------------------------------------------------
def _cross_embed_fused_kernel(col_offs, col_widths, *refs):
    nb = len(col_offs)
    x_refs = refs[:nb]
    w_refs = refs[nb:2 * nb]
    b_ref = refs[2 * nb]
    o_ref = refs[2 * nb + 1]

    for i in range(nb):
        lo = col_offs[i]        # static, multiple of 128
        cw = col_widths[i]      # static, multiple of 128
        # taps folded into the contraction: (TILE_M, K^2*Cin) @ (K^2*Cin, cw)
        acc = jnp.dot(x_refs[i][...], w_refs[i][...],
                      preferred_element_type=jnp.float32)
        # single unmasked, 128-aligned store per branch slice (f32 accumulate,
        # cast at finalize).
        o_ref[:, lo:lo + cw] = (acc + b_ref[:, lo:lo + cw]).astype(o_ref.dtype)


def _pick_tile_m(m, d_list, cpads, vmem_budget_bytes):
    """Largest TILE_M (mult of 8, <= round_up(M,8)) fitting the VMEM budget."""
    c_total = sum(cpads)
    m8 = max(8, _round_up(m, 8))
    for t in (1024, 512, 256, 128, 64, 32, 16, 8):
        if t > m8:
            continue
        need = (2 * t * sum(d_list) * 2                                # bf16 patch tiles, double-buffered
                + 2 * sum(d * c for d, c in zip(d_list, cpads)) * 2    # bf16 weights (conservative x2)
                + 2 * t * c_total * 4                                  # f32 output tiles, double-buffered
                + 2 * c_total * 4)                                     # bias
        if need <= vmem_budget_bytes:
            return t
    return 8


def cross_embed_forward(x_nchw, weights, biases, *, kernel_sizes, stride,
                        vmem_budget_bytes=24 * 1024 * 1024,
                        vmem_limit_bytes=32 * 1024 * 1024):
    """weights[b]: (cout_b, Cin, K_b, K_b) f32 (OIHW); biases[b]: (cout_b,)."""
    N, Cin, H, W = x_nchw.shape
    S = stride
    couts = [int(w.shape[0]) for w in weights]
    dim_out = sum(couts)

    # padding rule (K - S) // 2 gives the same output size for every branch
    Ho = (H - S) // S + 1
    Wo = (W - S) // S + 1
    M = N * Ho * Wo

    # ---- glue: NCHW -> NHWC bf16, ONE shared max-padding for all branches
    x_nhwc = jnp.transpose(x_nchw, (0, 2, 3, 1)).astype(jnp.bfloat16)
    k_max = max(kernel_sizes)
    p_max = (k_max - S) // 2
    x_pad = jnp.pad(x_nhwc, ((0, 0), (p_max, p_max), (p_max, p_max), (0, 0)))

    # per-branch padded Cout (lane-dense, 128-aligned output slices)
    cpads = [max(128, _round_up(c, 128)) for c in couts]
    col_offs = [0]
    for c in cpads[:-1]:
        col_offs.append(col_offs[-1] + c)
    c_total = sum(cpads)

    d_list = [K * K * Cin for K in kernel_sizes]
    tile_m = _pick_tile_m(M, d_list, cpads, vmem_budget_bytes)
    m_pad = _round_up(M, tile_m)

    # ---- per-branch im2col (taps folded into the contraction dim) + weights
    patch_list, w_list = [], []
    for K, w in zip(kernel_sizes, weights):
        off = (k_max - K) // 2          # branch offset inside the shared pad
        cols = []
        for kh in range(K):
            for kw in range(K):
                r0 = off + kh
                c0 = off + kw
                v = x_pad[:, r0:r0 + (Ho - 1) * S + 1:S,
                             c0:c0 + (Wo - 1) * S + 1:S, :]
                cols.append(v)                       # (N, Ho, Wo, Cin)
        p = jnp.stack(cols, axis=3).reshape(M, K * K * Cin)   # (kh,kw,cin)
        if m_pad != M:
            p = jnp.pad(p, ((0, m_pad - M), (0, 0)))
        patch_list.append(p)

        cout = int(w.shape[0])
        cpad = max(128, _round_up(cout, 128))
        wt = jnp.transpose(w, (2, 3, 1, 0)).reshape(K * K * Cin, cout)
        if cpad != cout:
            wt = jnp.pad(wt, ((0, 0), (0, cpad - cout)))
        w_list.append(wt.astype(jnp.bfloat16))

    bias_parts = [jnp.pad(b.astype(jnp.float32), (0, cpad - c))
                  for b, c, cpad in zip(biases, couts, cpads)]
    bias_full = jnp.concatenate(bias_parts).reshape(1, c_total)

    # ---- fused pallas_call
    n_m_tiles = m_pad // tile_m
    nb = len(kernel_sizes)

    in_specs = []
    for d in d_list:
        # v6e: if profiling shows exposed DMA on this patch stream, add
        # pipeline_mode=pl.Buffered(3) here.
        in_specs.append(pl.BlockSpec((tile_m, d), lambda i: (i, 0)))
    for d, cpad in zip(d_list, cpads):
        in_specs.append(pl.BlockSpec((d, cpad), lambda i: (0, 0)))
    in_specs.append(pl.BlockSpec((1, c_total), lambda i: (0, 0)))
    out_specs = pl.BlockSpec((tile_m, c_total), lambda i: (i, 0))

    flops = 2 * m_pad * sum(d * c for d, c in zip(d_list, cpads))
    bytes_accessed = (sum(m_pad * d * 2 for d in d_list)
                      + sum(d * c * 2 for d, c in zip(d_list, cpads))
                      + c_total * 4 + m_pad * c_total * 4)

    kernel = partial(_cross_embed_fused_kernel, tuple(col_offs), tuple(cpads))

    out_flat = pl.pallas_call(
        kernel,
        out_shape=jax.ShapeDtypeStruct((m_pad, c_total), jnp.float32),
        grid_spec=pltpu.PrefetchScalarGridSpec(
            num_scalar_prefetch=0,
            grid=(n_m_tiles,),
            in_specs=in_specs,
            out_specs=out_specs,
        ),
        compiler_params=pltpu.CompilerParams(
            dimension_semantics=("parallel",),   # megacore sharding on v7x
            vmem_limit_bytes=vmem_limit_bytes,
        ),
        cost_estimate=pl.CostEstimate(
            flops=flops, transcendentals=0, bytes_accessed=bytes_accessed),
    )(*patch_list, *w_list, bias_full)

    # ---- glue: drop M/channel padding, restore NCHW (torch.cat(dim=1) order)
    branch_outs = [out_flat[:M, off:off + c]
                   for off, c in zip(col_offs, couts)]
    out = jnp.concatenate(branch_outs, axis=-1)          # (M, dim_out)
    out = out.reshape(N, Ho, Wo, dim_out)
    return jnp.transpose(out, (0, 3, 1, 2))


# ---------------------------------------------------------------------------
# CrossEmbedLayer wrapper (parameter init mirrors nn.Conv2d defaults)
# ---------------------------------------------------------------------------
class CrossEmbedLayer:
    def __init__(self, key, dim_in, kernel_sizes, dim_out=None, stride=2):
        assert all(k % 2 == stride % 2 for k in kernel_sizes)
        dim_out = default(dim_out, dim_in)
        kernel_sizes = sorted(kernel_sizes)
        num_scales = len(kernel_sizes)
        dim_scales = [int(dim_out / 2 ** i) for i in range(1, num_scales)]
        dim_scales = [*dim_scales, dim_out - sum(dim_scales)]

        self.dim_in = dim_in
        self.dim_out = dim_out
        self.stride = stride
        self.kernel_sizes = kernel_sizes
        self.dim_scales = dim_scales

        self.weights, self.biases = [], []
        for kernel, dim_scale in zip(kernel_sizes, dim_scales):
            key, kw_, kb_ = jax.random.split(key, 3)
            fan_in = dim_in * kernel * kernel
            bound = 1.0 / math.sqrt(fan_in)
            w = jax.random.uniform(
                kw_, (dim_scale, dim_in, kernel, kernel),
                minval=-bound, maxval=bound, dtype=jnp.float32)
            b = jax.random.uniform(
                kb_, (dim_scale,), minval=-bound, maxval=bound,
                dtype=jnp.float32)
            self.weights.append(w)
            self.biases.append(b)

        self._forward = jax.jit(partial(
            cross_embed_forward,
            kernel_sizes=tuple(self.kernel_sizes),
            stride=self.stride))

    def __call__(self, x_nchw):
        return self._forward(x_nchw, self.weights, self.biases)


# ---------------------------------------------------------------------------
# Pure-JAX reference (lax conv on the same bf16-rounded operands)
# ---------------------------------------------------------------------------
def _reference(layer, x_nchw):
    xr = x_nchw.astype(jnp.bfloat16).astype(jnp.float32)
    outs = []
    for K, w, b in zip(layer.kernel_sizes, layer.weights, layer.biases):
        wr = w.astype(jnp.bfloat16).astype(jnp.float32)
        P = (K - layer.stride) // 2
        y = lax.conv_general_dilated(
            xr, wr,
            window_strides=(layer.stride, layer.stride),
            padding=((P, P), (P, P)),
            dimension_numbers=("NCHW", "OIHW", "NCHW"),
            precision=lax.Precision.HIGHEST)
        outs.append(y + b.reshape(1, -1, 1, 1))
    return jnp.concatenate(outs, axis=1)


if __name__ == "__main__":
    key = jax.random.PRNGKey(0)
    k_param, k_x = jax.random.split(key)

    # small shapes consistent with the module; stride=2 requires even kernels
    dim_in, dim_out = 4, 8
    kernel_sizes = (4, 8, 16)
    layer = CrossEmbedLayer(k_param, dim_in, kernel_sizes,
                            dim_out=dim_out, stride=2)

    x = jax.random.normal(k_x, (2, dim_in, 16, 16), dtype=jnp.float32)  # NCHW

    out = jax.block_until_ready(layer(x))

    ref = _reference(layer, x)
    assert out.shape == (2, dim_out, 8, 8), out.shape
    max_err = float(jnp.max(jnp.abs(out - ref)))
    assert jnp.allclose(out, ref, rtol=2e-3, atol=2e-3), max_err
    print("KERNEL_OK")
</pallas_src>

<mosaic_0001>
module attributes {stable_mosaic.version = 11 : i64} {
  func.func @_cross_embed_fused_kernel(%arg0: i32, %arg1: memref<128x64xbf16, #tpu.memory_space<vmem>>, %arg2: memref<128x256xbf16, #tpu.memory_space<vmem>>, %arg3: memref<128x1024xbf16, #tpu.memory_space<vmem>>, %arg4: memref<64x128xbf16, #tpu.memory_space<vmem>>, %arg5: memref<256x128xbf16, #tpu.memory_space<vmem>>, %arg6: memref<1024x128xbf16, #tpu.memory_space<vmem>>, %arg7: memref<1x384xf32, #tpu.memory_space<vmem>>, %arg8: memref<128x384xf32, #tpu.memory_space<vmem>>) attributes {dimension_semantics = [#tpu.dimension_semantics<parallel>], iteration_bounds = array<i64: 1>, scalar_prefetch = 0 : i64, scratch_operands = 0 : i64, tpu.core_type = #tpu.core_type<tc>, window_params = [{transform_indices = @transform_0, window_bounds = array<i64: 128, 64>}, {transform_indices = @transform_1, window_bounds = array<i64: 128, 256>}, {transform_indices = @transform_2, window_bounds = array<i64: 128, 1024>}, {pipeline_mode = #tpu.pipeline_mode<synchronous>, transform_indices = @transform_3, window_bounds = array<i64: 64, 128>}, {pipeline_mode = #tpu.pipeline_mode<synchronous>, transform_indices = @transform_4, window_bounds = array<i64: 256, 128>}, {pipeline_mode = #tpu.pipeline_mode<synchronous>, transform_indices = @transform_5, window_bounds = array<i64: 1024, 128>}, {pipeline_mode = #tpu.pipeline_mode<synchronous>, transform_indices = @transform_6, window_bounds = array<i64: 1, 384>}, {transform_indices = @transform_7, window_bounds = array<i64: 128, 384>}]} {
    %c0 = arith.constant 0 : index
    %c0_0 = arith.constant 0 : index
    %0 = vector.load %arg1[%c0, %c0_0] : memref<128x64xbf16, #tpu.memory_space<vmem>>, vector<128x64xbf16>
    %c0_1 = arith.constant 0 : index
    %c0_2 = arith.constant 0 : index
    %1 = vector.load %arg4[%c0_1, %c0_2] : memref<64x128xbf16, #tpu.memory_space<vmem>>, vector<64x128xbf16>
    %cst = arith.constant dense<0.000000e+00> : vector<128x128xf32>
    %2 = tpu.matmul %0, %1, %cst {dimension_numbers = #tpu.dot_dimension_numbers<[1], [0], [0], [1], [0, 0, 1, 1], [], []>} : vector<128x64xbf16>, vector<64x128xbf16>, vector<128x128xf32> -> vector<128x128xf32>
    %c0_3 = arith.constant 0 : index
    %c0_4 = arith.constant 0 : index
    %3 = vector.load %arg7[%c0_3, %c0_4] : memref<1x384xf32, #tpu.memory_space<vmem>>, vector<1x128xf32>
    %4 = vector.broadcast %3 : vector<1x128xf32> to vector<128x128xf32>
    %5 = arith.addf %2, %4 : vector<128x128xf32>
    %c0_5 = arith.constant 0 : index
    %c0_6 = arith.constant 0 : index
    %6 = vector.load %arg8[%c0_5, %c0_6] : memref<128x384xf32, #tpu.memory_space<vmem>>, vector<128x128xf32>
    tpu.vector_store %arg8[%c0_5, %c0_6], %5 {strides = array<i32>} : memref<128x384xf32, #tpu.memory_space<vmem>>, vector<128x128xf32>,
    %c0_7 = arith.constant 0 : index
    %c0_8 = arith.constant 0 : index
    %7 = vector.load %arg2[%c0_7, %c0_8] : memref<128x256xbf16, #tpu.memory_space<vmem>>, vector<128x256xbf16>
    %c0_9 = arith.constant 0 : index
    %c0_10 = arith.constant 0 : index
    %8 = vector.load %arg5[%c0_9, %c0_10] : memref<256x128xbf16, #tpu.memory_space<vmem>>, vector<256x128xbf16>
    %cst_11 = arith.constant dense<0.000000e+00> : vector<128x128xf32>
    %9 = tpu.matmul %7, %8, %cst_11 {dimension_numbers = #tpu.dot_dimension_numbers<[1], [0], [0], [1], [0, 0, 1, 1], [], []>} : vector<128x256xbf16>, vector<256x128xbf16>, vector<128x128xf32> -> vector<128x128xf32>
    %c0_12 = arith.constant 0 : index
    %c128 = arith.constant 128 : index
    %10 = vector.load %arg7[%c0_12, %c128] : memref<1x384xf32, #tpu.memory_space<vmem>>, vector<1x128xf32>
    %11 = vector.broadcast %10 : vector<1x128xf32> to vector<128x128xf32>
    %12 = arith.addf %9, %11 : vector<128x128xf32>
    %c0_13 = arith.constant 0 : index
    %c128_14 = arith.constant 128 : index
    %13 = vector.load %arg8[%c0_13, %c128_14] : memref<128x384xf32, #tpu.memory_space<vmem>>, vector<128x128xf32>
    tpu.vector_store %arg8[%c0_13, %c128_14], %12 {strides = array<i32>} : memref<128x384xf32, #tpu.memory_space<vmem>>, vector<128x128xf32>,
    %c0_15 = arith.constant 0 : index
    %c0_16 = arith.constant 0 : index
    %14 = vector.load %arg3[%c0_15, %c0_16] : memref<128x1024xbf16, #tpu.memory_space<vmem>>, vector<128x1024xbf16>
    %c0_17 = arith.constant 0 : index
    %c0_18 = arith.constant 0 : index
    %15 = vector.load %arg6[%c0_17, %c0_18] : memref<1024x128xbf16, #tpu.memory_space<vmem>>, vector<1024x128xbf16>
    %cst_19 = arith.constant dense<0.000000e+00> : vector<128x128xf32>
    %16 = tpu.matmul %14, %15, %cst_19 {dimension_numbers = #tpu.dot_dimension_numbers<[1], [0], [0], [1], [0, 0, 1, 1], [], []>} : vector<128x1024xbf16>, vector<1024x128xbf16>, vector<128x128xf32> -> vector<128x128xf32>
    %c0_20 = arith.constant 0 : index
    %c256 = arith.constant 256 : index
    %17 = vector.load %arg7[%c0_20, %c256] : memref<1x384xf32, #tpu.memory_space<vmem>>, vector<1x128xf32>
    %18 = vector.broadcast %17 : vector<1x128xf32> to vector<128x128xf32>
    %19 = arith.addf %16, %18 : vector<128x128xf32>
    %c0_21 = arith.constant 0 : index
    %c256_22 = arith.constant 256 : index
    %20 = vector.load %arg8[%c0_21, %c256_22] : memref<128x384xf32, #tpu.memory_space<vmem>>, vector<128x128xf32>
    tpu.vector_store %arg8[%c0_21, %c256_22], %19 {strides = array<i32>} : memref<128x384xf32, #tpu.memory_space<vmem>>, vector<128x128xf32>,
    return
  }
  func.func @transform_0(%arg0: i32) -> (i32, i32) {
    %c0_i32 = arith.constant 0 : i32
    %c0_i32_0 = arith.constant 0 : i32
    return %arg0, %c0_i32 : i32, i32
  }
  func.func @transform_1(%arg0: i32) -> (i32, i32) {
    %c0_i32 = arith.constant 0 : i32
    %c0_i32_0 = arith.constant 0 : i32
    return %arg0, %c0_i32 : i32, i32
  }
  func.func @transform_2(%arg0: i32) -> (i32, i32) {
    %c0_i32 = arith.constant 0 : i32
    %c0_i32_0 = arith.constant 0 : i32
    return %arg0, %c0_i32 : i32, i32
  }
  func.func @transform_3(%arg0: i32) -> (i32, i32) {
    %c0_i32 = arith.constant 0 : i32
    %c0_i32_0 = arith.constant 0 : i32
    %c0_i32_1 = arith.constant 0 : i32
    return %c0_i32, %c0_i32_0 : i32, i32
  }
  func.func @transform_4(%arg0: i32) -> (i32, i32) {
    %c0_i32 = arith.constant 0 : i32
    %c0_i32_0 = arith.constant 0 : i32
    %c0_i32_1 = arith.constant 0 : i32
    return %c0_i32, %c0_i32_0 : i32, i32
  }
  func.func @transform_5(%arg0: i32) -> (i32, i32) {
    %c0_i32 = arith.constant 0 : i32
    %c0_i32_0 = arith.constant 0 : i32
    %c0_i32_1 = arith.constant 0 : i32
    return %c0_i32, %c0_i32_0 : i32, i32
  }
  func.func @transform_6(%arg0: i32) -> (i32, i32) {
    %c0_i32 = arith.constant 0 : i32
    %c0_i32_0 = arith.constant 0 : i32
    %c0_i32_1 = arith.constant 0 : i32
    return %c0_i32, %c0_i32_0 : i32, i32
  }
  func.func @transform_7(%arg0: i32) -> (i32, i32) {
    %c0_i32 = arith.constant 0 : i32
    %c0_i32_0 = arith.constant 0 : i32
    return %arg0, %c0_i32 : i32, i32
  }
}

</mosaic_0001>

<llo_original>
// kernel: cross_embed_forward.1
$region0: #{cross_embed_forward.1}
  #allocation0 [shape = 'u32[]', space=smem, size = 0x4, offset = 0x4, fixed_abs, tag = 'smem constant byte address 0x4 - core index']
  #allocation1 [shape = 'u32[72,128]{1,0:T(1,128)}', space=vmem, size = 0x9000, scoped, tag = 'internal scratch']
  %s0 = inlined_call_operand.vmem [shape: bf16[128,64], index: 0, kind: input, shape index: {}]
  %s1 = inlined_call_operand.vmem [shape: bf16[128,256], index: 1, kind: input, shape index: {}]
  %s2 = inlined_call_operand.vmem [shape: bf16[128,1024], index: 2, kind: input, shape index: {}]
  %s3 = inlined_call_operand.vmem [shape: bf16[64,128], index: 3, kind: input, shape index: {}]
  %s4 = inlined_call_operand.vmem [shape: bf16[256,128], index: 4, kind: input, shape index: {}]
  %s5 = inlined_call_operand.vmem [shape: bf16[1024,128], index: 5, kind: input, shape index: {}]
  %s6 = inlined_call_operand.vmem [shape: f32[1,384], index: 6, kind: input, shape index: {}]
  %s7 = inlined_call_operand.vmem [shape: f32[128,384], index: 7, kind: output, shape index: {}]
  %s8 = sld [smem:[#allocation0]]
  $region38: #{cross_embed_forward.1} parent=0
    _
  %s10 = ssub.s32 1, %s8
  %s11 = scalar_select 0, %s10, %s8
  // Predicated region
  $region2: #{cross_embed_forward.1} parent=0 // pred_check
    _
  $region3: #{cross_embed_forward.1} parent=0 // pred_check_branch
    %13 = sbr.rel (0) target = $region5
  $region4: #{cross_embed_forward.1} parent=0 // pred_region
    _
  $region5: #{cross_embed_forward.1} parent=0 // pred_fallthru
    _
  // Predicated region
  $region6: #{cross_embed_forward.1} parent=0 // pred_check
    _
  $region7: #{cross_embed_forward.1} parent=0 // pred_check_branch
    %15 = sbr.rel (0) target = $region9
  $region8: #{cross_embed_forward.1} parent=0 // pred_region
    _
  $region9: #{cross_embed_forward.1} parent=0 // pred_fallthru
    _
  // Predicated region
  $region10: #{cross_embed_forward.1} parent=0 // pred_check
    _
  $region11: #{cross_embed_forward.1} parent=0 // pred_check_branch
    %17 = sbr.rel (0) target = $region13
  $region12: #{cross_embed_forward.1} parent=0 // pred_region
    _
  $region13: #{cross_embed_forward.1} parent=0 // pred_fallthru
    _
  // Predicated region
  $region14: #{cross_embed_forward.1} parent=0 // pred_check
    _
  $region15: #{cross_embed_forward.1} parent=0 // pred_check_branch
    %19 = sbr.rel (0) target = $region17
  $region16: #{cross_embed_forward.1} parent=0 // pred_region
    _
  $region17: #{cross_embed_forward.1} parent=0 // pred_fallthru
    _
  // Predicated region
  $region18: #{cross_embed_forward.1} parent=0 // pred_check
    _
  $region19: #{cross_embed_forward.1} parent=0 // pred_check_branch
    %21 = sbr.rel (0) target = $region21
  $region20: #{cross_embed_forward.1} parent=0 // pred_region
    _
  $region21: #{cross_embed_forward.1} parent=0 // pred_fallthru
    _
  // Predicated region
  $region22: #{cross_embed_forward.1} parent=0 // pred_check
    _
  $region23: #{cross_embed_forward.1} parent=0 // pred_check_branch
    %23 = sbr.rel (0) target = $region25
  $region24: #{cross_embed_forward.1} parent=0 // pred_region
    _
  $region25: #{cross_embed_forward.1} parent=0 // pred_fallthru
    _
  // Predicated region
  $region26: #{cross_embed_forward.1} parent=0 // pred_check
    _
  $region27: #{cross_embed_forward.1} parent=0 // pred_check_branch
    %25 = sbr.rel (0) target = $region29
  $region28: #{cross_embed_forward.1} parent=0 // pred_region
    _
  $region29: #{cross_embed_forward.1} parent=0 // pred_fallthru
    _
  %v27 = vld [vmem:[%s0] sm:$0xf]
  %v28 = vld [vmem:[%s0 + $0x4] sm:$0xf]
  %v29 = vld [vmem:[%s0 + $0x8] sm:$0xf]
  %v30 = vld [vmem:[%s0 + $0xc] sm:$0xf]
  %v31 = vld [vmem:[%s0 + $0x10] sm:$0xf]
  %v32 = vld [vmem:[%s0 + $0x14] sm:$0xf]
  %v33 = vld [vmem:[%s0 + $0x18] sm:$0xf]
  %v34 = vld [vmem:[%s0 + $0x1c] sm:$0xf]
  %v35 = vld [vmem:[%s0 + $0x20] sm:$0xf]
  %v36 = vld [vmem:[%s0 + $0x24] sm:$0xf]
  %v37 = vld [vmem:[%s0 + $0x28] sm:$0xf]
  %v38 = vld [vmem:[%s0 + $0x2c] sm:$0xf]
  %v39 = vld [vmem:[%s0 + $0x30] sm:$0xf]
  %v40 = vld [vmem:[%s0 + $0x34] sm:$0xf]
  %v41 = vld [vmem:[%s0 + $0x38] sm:$0xf]
  %v42 = vld [vmem:[%s0 + $0x3c] sm:$0xf]
  %v43 = vld [vmem:[%s3] sm:$0xf]
  %v44 = vld [vmem:[%s3 + $0x4] sm:$0xf]
  %v45 = vld [vmem:[%s3 + $0x8] sm:$0xf]
  %v46 = vld [vmem:[%s3 + $0xc] sm:$0xf]
  %v47 = vld [vmem:[%s3 + $0x10] sm:$0xf]
  %v48 = vld [vmem:[%s3 + $0x14] sm:$0xf]
  %v49 = vld [vmem:[%s3 + $0x18] sm:$0xf]
  %v50 = vld [vmem:[%s3 + $0x1c] sm:$0xf]
  %v51 = vld [vmem:[%s6] sm:$0x1]
  %v53 = vperm.slane %v51, 0
  %v71 = vunpack.c.l.b16 %v27
  %v72 = vunpack.c.l.b16 %v28
  %v73 = vunpack.c.l.b16 %v29
  %v74 = vunpack.c.l.b16 %v30
  %v75 = vunpack.c.l.b16 %v31
  %v76 = vunpack.c.l.b16 %v32
  %v77 = vunpack.c.l.b16 %v33
  %v78 = vunpack.c.l.b16 %v34
  %v79 = vunpack.c.l.b16 %v35
  %v80 = vunpack.c.l.b16 %v36
  %v81 = vunpack.c.l.b16 %v37
  %v82 = vunpack.c.l.b16 %v38
  %v83 = vunpack.c.l.b16 %v39
  %v84 = vunpack.c.l.b16 %v40
  %v85 = vunpack.c.l.b16 %v41
  %v86 = vunpack.c.l.b16 %v42
  %v87 = vpack.c.b16 %v72, %v71
  %v88 = vpack.c.b16 %v74, %v73
  %v89 = vpack.c.b16 %v76, %v75
  %v90 = vpack.c.b16 %v78, %v77
  %v91 = vpack.c.b16 %v80, %v79
  %v92 = vpack.c.b16 %v82, %v81
  %v93 = vpack.c.b16 %v84, %v83
  %v94 = vpack.c.b16 %v86, %v85
  %v103 = vunpack.c.l.b16 %v43
  %v104 = vunpack.c.l.b16 %v44
  %v105 = vunpack.c.l.b16 %v45
  %v106 = vunpack.c.l.b16 %v46
  %v107 = vunpack.c.l.b16 %v47
  %v108 = vunpack.c.l.b16 %v48
  %v109 = vunpack.c.l.b16 %v49
  %v110 = vunpack.c.l.b16 %v50
  %v111 = vpack.c.b16 %v104, %v103
  %v112 = vpack.c.b16 %v106, %v105
  %v113 = vpack.c.b16 %v108, %v107
  %v114 = vpack.c.b16 %v110, %v109
  %vm119 = vcmask 523264
  %v121 = vsel %vm119, %v87, 0
  %v124 = vsel %vm119, %v88, 0
  %v127 = vsel %vm119, %v89, 0
  %v130 = vsel %vm119, %v90, 0
  %v133 = vsel %vm119, %v91, 0
  %v136 = vsel %vm119, %v92, 0
  %v139 = vsel %vm119, %v93, 0
  %v142 = vsel %vm119, %v94, 0
  %144 = vmatpush.bf16.msra.mxu0 0
  %145 = vmatpush.bf16.msra.mxu0 0
  %146 = vmatpush.bf16.msra.mxu0 0
  %147 = vmatpush.bf16.msra.mxu0 0
  %148 = vmatpush.bf16.msra.mxu0 %v114
  %149 = vmatpush.bf16.msra.mxu0 %v113
  %150 = vmatpush.bf16.msra.mxu0 %v112
  %151 = vmatpush.bf16.msra.mxu0 %v111
  %152 = vmatmul.bf16.gmra.mxu0 %v121
  %v153 = vpop.f32.mrf.mxu0
  %v154 = vadd.f32 %v53, %v153
  %v155 = vpop.f32.mrf.mxu0
  %v156 = vadd.f32 %v53, %v155
  %157 = vmatmul.bf16.gmra.mxu0 %v124
  %v158 = vpop.f32.mrf.mxu0
  %v159 = vadd.f32 %v53, %v158
  %v160 = vpop.f32.mrf.mxu0
  %v161 = vadd.f32 %v53, %v160
  %162 = vmatmul.bf16.gmra.mxu0 %v127
  %v163 = vpop.f32.mrf.mxu0
  %v164 = vadd.f32 %v53, %v163
  %v165 = vpop.f32.mrf.mxu0
  %v166 = vadd.f32 %v53, %v165
  %167 = vmatmul.bf16.gmra.mxu0 %v130
  %v168 = vpop.f32.mrf.mxu0
  %v169 = vadd.f32 %v53, %v168
  %v170 = vpop.f32.mrf.mxu0
  %v171 = vadd.f32 %v53, %v170
  %172 = vmatmul.bf16.gmra.mxu0 %v133
  %v173 = vpop.f32.mrf.mxu0
  %v174 = vadd.f32 %v53, %v173
  %v175 = vpop.f32.mrf.mxu0
  %v176 = vadd.f32 %v53, %v175
  %177 = vmatmul.bf16.gmra.mxu0 %v136
  %v178 = vpop.f32.mrf.mxu0
  %v179 = vadd.f32 %v53, %v178
  %v180 = vpop.f32.mrf.mxu0
  %v181 = vadd.f32 %v53, %v180
  %182 = vmatmul.bf16.gmra.mxu0 %v139
  %v183 = vpop.f32.mrf.mxu0
  %v184 = vadd.f32 %v53, %v183
  %v185 = vpop.f32.mrf.mxu0
  %v186 = vadd.f32 %v53, %v185
  %187 = vmatmul.bf16.gmra.mxu0 %v142
  %v188 = vpop.f32.mrf.mxu0
  %v189 = vadd.f32 %v53, %v188
  %v190 = vpop.f32.mrf.mxu0
  %v191 = vadd.f32 %v53, %v190
  %192 = vdwg.mxu0
  %193 = vst [vmem:[%s7] sm:$0xff] %v154
  %194 = vst [vmem:[%s7 + $0x18] sm:$0xff] %v156
  %195 = vst [vmem:[%s7 + $0x30] sm:$0xff] %v159
  %196 = vst [vmem:[%s7 + $0x48] sm:$0xff] %v161
  %197 = vst [vmem:[%s7 + $0x60] sm:$0xff] %v164
  %198 = vst [vmem:[%s7 + $0x78] sm:$0xff] %v166
  %199 = vst [vmem:[%s7 + $0x90] sm:$0xff] %v169
  %200 = vst [vmem:[%s7 + $0xa8] sm:$0xff] %v171
  %201 = vst [vmem:[%s7 + $0xc0] sm:$0xff] %v174
  %202 = vst [vmem:[%s7 + $0xd8] sm:$0xff] %v176
  %203 = vst [vmem:[%s7 + $0xf0] sm:$0xff] %v179
  %204 = vst [vmem:[%s7 + $0x108] sm:$0xff] %v181
  %205 = vst [vmem:[%s7 + $0x120] sm:$0xff] %v184
  %206 = vst [vmem:[%s7 + $0x138] sm:$0xff] %v186
  %207 = vst [vmem:[%s7 + $0x150] sm:$0xff] %v189
  %208 = vst [vmem:[%s7 + $0x168] sm:$0xff] %v191
  %v209 = vld [vmem:[%s1] sm:$0xff]
  %v210 = vld [vmem:[%s1 + $0x8] sm:$0xff]
  %v211 = vld [vmem:[%s1 + $0x10] sm:$0xff]
  %v212 = vld [vmem:[%s1 + $0x18] sm:$0xff]
  %v213 = vld [vmem:[%s1 + $0x20] sm:$0xff]
  %v214 = vld [vmem:[%s1 + $0x28] sm:$0xff]
  %v215 = vld [vmem:[%s1 + $0x30] sm:$0xff]
  %v216 = vld [vmem:[%s1 + $0x38] sm:$0xff]
  %v217 = vld [vmem:[%s1 + $0x40] sm:$0xff]
  %v218 = vld [vmem:[%s1 + $0x48] sm:$0xff]
  %v219 = vld [vmem:[%s1 + $0x50] sm:$0xff]
  %v220 = vld [vmem:[%s1 + $0x58] sm:$0xff]
  %v221 = vld [vmem:[%s1 + $0x60] sm:$0xff]
  %v222 = vld [vmem:[%s1 + $0x68] sm:$0xff]
  %v223 = vld [vmem:[%s1 + $0x70] sm:$0xff]
  %v224 = vld [vmem:[%s1 + $0x78] sm:$0xff]
  %v225 = vld [vmem:[%s4] sm:$0xf]
  %v226 = vld [vmem:[%s4 + $0x4] sm:$0xf]
  %v227 = vld [vmem:[%s4 + $0x8] sm:$0xf]
  %v228 = vld [vmem:[%s4 + $0xc] sm:$0xf]
  %v229 = vld [vmem:[%s4 + $0x10] sm:$0xf]
  %v230 = vld [vmem:[%s4 + $0x14] sm:$0xf]
  %v231 = vld [vmem:[%s4 + $0x18] sm:$0xf]
  %v232 = vld [vmem:[%s4 + $0x1c] sm:$0xf]
  %v233 = vld [vmem:[%s4 + $0x20] sm:$0xf]
  %v234 = vld [vmem:[%s4 + $0x24] sm:$0xf]
  %v235 = vld [vmem:[%s4 + $0x28] sm:$0xf]
  %v236 = vld [vmem:[%s4 + $0x2c] sm:$0xf]
  %v237 = vld [vmem:[%s4 + $0x30] sm:$0xf]
  %v238 = vld [vmem:[%s4 + $0x34] sm:$0xf]
  %v239 = vld [vmem:[%s4 + $0x38] sm:$0xf]
  %v240 = vld [vmem:[%s4 + $0x3c] sm:$0xf]
  %v241 = vld [vmem:[%s4 + $0x40] sm:$0xf]
  %v242 = vld [vmem:[%s4 + $0x44] sm:$0xf]
  %v243 = vld [vmem:[%s4 + $0x48] sm:$0xf]
  %v244 = vld [vmem:[%s4 + $0x4c] sm:$0xf]
  %v245 = vld [vmem:[%s4 + $0x50] sm:$0xf]
  %v246 = vld [vmem:[%s4 + $0x54] sm:$0xf]
  %v247 = vld [vmem:[%s4 + $0x58] sm:$0xf]
  %v248 = vld [vmem:[%s4 + $0x5c] sm:$0xf]
  %v249 = vld [vmem:[%s4 + $0x60] sm:$0xf]
  %v250 = vld [vmem:[%s4 + $0x64] sm:$0xf]
  %v251 = vld [vmem:[%s4 + $0x68] sm:$0xf]
  %v252 = vld [vmem:[%s4 + $0x6c] sm:$0xf]
  %v253 = vld [vmem:[%s4 + $0x70] sm:$0xf]
  %v254 = vld [vmem:[%s4 + $0x74] sm:$0xf]
  %v255 = vld [vmem:[%s4 + $0x78] sm:$0xf]
  %v256 = vld [vmem:[%s4 + $0x7c] sm:$0xf]
  %v257 = vld [vmem:[%s6 + $0x1] sm:$0x1]
  %v259 = vperm.slane %v257, 0
  %v277 = vunpack.c.l.b16 %v209
  %v278 = vunpack.c.h.b16 %v209
  %v279 = vunpack.c.l.b16 %v210
  %v280 = vunpack.c.h.b16 %v210
  %v281 = vunpack.c.l.b16 %v211
  %v282 = vunpack.c.h.b16 %v211
  %v283 = vunpack.c.l.b16 %v212
  %v284 = vunpack.c.h.b16 %v212
  %v285 = vunpack.c.l.b16 %v213
  %v286 = vunpack.c.h.b16 %v213
  %v287 = vunpack.c.l.b16 %v214
  %v288 = vunpack.c.h.b16 %v214
  %v289 = vunpack.c.l.b16 %v215
  %v290 = vunpack.c.h.b16 %v215
  %v291 = vunpack.c.l.b16 %v216
  %v292 = vunpack.c.h.b16 %v216
  %v293 = vunpack.c.l.b16 %v217
  %v294 = vunpack.c.h.b16 %v217
  %v295 = vunpack.c.l.b16 %v218
  %v296 = vunpack.c.h.b16 %v218
  %v297 = vunpack.c.l.b16 %v219
  %v298 = vunpack.c.h.b16 %v219
  %v299 = vunpack.c.l.b16 %v220
  %v300 = vunpack.c.h.b16 %v220
  %v301 = vunpack.c.l.b16 %v221
  %v302 = vunpack.c.h.b16 %v221
  %v303 = vunpack.c.l.b16 %v222
  %v304 = vunpack.c.h.b16 %v222
  %v305 = vunpack.c.l.b16 %v223
  %v306 = vunpack.c.h.b16 %v223
  %v307 = vunpack.c.l.b16 %v224
  %v308 = vunpack.c.h.b16 %v224
  %v309 = vpack.c.b16 %v279, %v277
  %v310 = vpack.c.b16 %v280, %v278
  %v311 = vpack.c.b16 %v283, %v281
  %v312 = vpack.c.b16 %v284, %v282
  %v313 = vpack.c.b16 %v287, %v285
  %v314 = vpack.c.b16 %v288, %v286
  %v315 = vpack.c.b16 %v291, %v289
  %v316 = vpack.c.b16 %v292, %v290
  %v317 = vpack.c.b16 %v295, %v293
  %v318 = vpack.c.b16 %v296, %v294
  %v319 = vpack.c.b16 %v299, %v297
  %v320 = vpack.c.b16 %v300, %v298
  %v321 = vpack.c.b16 %v303, %v301
  %v322 = vpack.c.b16 %v304, %v302
  %v323 = vpack.c.b16 %v307, %v305
  %v324 = vpack.c.b16 %v308, %v306
  %v373 = vunpack.c.l.b16 %v225
  %v374 = vunpack.c.l.b16 %v226
  %v375 = vunpack.c.l.b16 %v227
  %v376 = vunpack.c.l.b16 %v228
  %v377 = vunpack.c.l.b16 %v229
  %v378 = vunpack.c.l.b16 %v230
  %v379 = vunpack.c.l.b16 %v231
  %v380 = vunpack.c.l.b16 %v232
  %v381 = vunpack.c.l.b16 %v233
  %v382 = vunpack.c.l.b16 %v234
  %v383 = vunpack.c.l.b16 %v235
  %v384 = vunpack.c.l.b16 %v236
  %v385 = vunpack.c.l.b16 %v237
  %v386 = vunpack.c.l.b16 %v238
  %v387 = vunpack.c.l.b16 %v239
  %v388 = vunpack.c.l.b16 %v240
  %v389 = vunpack.c.l.b16 %v241
  %v390 = vunpack.c.l.b16 %v242
  %v391 = vunpack.c.l.b16 %v243
  %v392 = vunpack.c.l.b16 %v244
  %v393 = vunpack.c.l.b16 %v245
  %v394 = vunpack.c.l.b16 %v246
  %v395 = vunpack.c.l.b16 %v247
  %v396 = vunpack.c.l.b16 %v248
  %v397 = vunpack.c.l.b16 %v249
  %v398 = vunpack.c.l.b16 %v250
  %v399 = vunpack.c.l.b16 %v251
  %v400 = vunpack.c.l.b16 %v252
  %v401 = vunpack.c.l.b16 %v253
  %v402 = vunpack.c.l.b16 %v254
  %v403 = vunpack.c.l.b16 %v255
  %v404 = vunpack.c.l.b16 %v256
  %v405 = vpack.c.b16 %v374, %v373
  %v406 = vpack.c.b16 %v376, %v375
  %v407 = vpack.c.b16 %v378, %v377
  %v408 = vpack.c.b16 %v380, %v379
  %v409 = vpack.c.b16 %v382, %v381
  %v410 = vpack.c.b16 %v384, %v383
  %v411 = vpack.c.b16 %v386, %v385
  %v412 = vpack.c.b16 %v388, %v387
  %v413 = vpack.c.b16 %v390, %v389
  %v414 = vpack.c.b16 %v392, %v391
  %v415 = vpack.c.b16 %v394, %v393
  %v416 = vpack.c.b16 %v396, %v395
  %v417 = vpack.c.b16 %v398, %v397
  %v418 = vpack.c.b16 %v400, %v399
  %v419 = vpack.c.b16 %v402, %v401
  %v420 = vpack.c.b16 %v404, %v403
  %437 = vmatpush.bf16.msra.mxu0 %v412
  %438 = vmatpush.bf16.msra.mxu0 %v411
  %439 = vmatpush.bf16.msra.mxu0 %v410
  %440 = vmatpush.bf16.msra.mxu0 %v409
  %441 = vmatpush.bf16.msra.mxu0 %v408
  %442 = vmatpush.bf16.msra.mxu0 %v407
  %443 = vmatpush.bf16.msra.mxu0 %v406
  %444 = vmatpush.bf16.msra.mxu0 %v405
  %445 = vmatmul.bf16.gmra.mxu0 %v309
  %v446 = vpop.f32.mrf.mxu0
  %v447 = vadd.f32 %v259, %v446
  %v448 = vpop.f32.mrf.mxu0
  %v449 = vadd.f32 %v259, %v448
  %450 = vmatmul.bf16.gmra.mxu0 %v311
  %v451 = vpop.f32.mrf.mxu0
  %v452 = vadd.f32 %v259, %v451
  %v453 = vpop.f32.mrf.mxu0
  %v454 = vadd.f32 %v259, %v453
  %455 = vmatmul.bf16.gmra.mxu0 %v313
  %v456 = vpop.f32.mrf.mxu0
  %v457 = vadd.f32 %v259, %v456
  %v458 = vpop.f32.mrf.mxu0
  %v459 = vadd.f32 %v259, %v458
  %460 = vmatmul.bf16.gmra.mxu0 %v315
  %v461 = vpop.f32.mrf.mxu0
  %v462 = vadd.f32 %v259, %v461
  %v463 = vpop.f32.mrf.mxu0
  %v464 = vadd.f32 %v259, %v463
  %465 = vmatmul.bf16.gmra.mxu0 %v317
  %v466 = vpop.f32.mrf.mxu0
  %v467 = vadd.f32 %v259, %v466
  %v468 = vpop.f32.mrf.mxu0
  %v469 = vadd.f32 %v259, %v468
  %470 = vmatmul.bf16.gmra.mxu0 %v319
  %v471 = vpop.f32.mrf.mxu0
  %v472 = vadd.f32 %v259, %v471
  %v473 = vpop.f32.mrf.mxu0
  %v474 = vadd.f32 %v259, %v473
  %475 = vmatmul.bf16.gmra.mxu0 %v321
  %v476 = vpop.f32.mrf.mxu0
  %v477 = vadd.f32 %v259, %v476
  %v478 = vpop.f32.mrf.mxu0
  %v479 = vadd.f32 %v259, %v478
  %480 = vmatmul.bf16.gmra.mxu0 %v323
  %v481 = vpop.f32.mrf.mxu0
  %v482 = vadd.f32 %v259, %v481
  %v483 = vpop.f32.mrf.mxu0
  %v484 = vadd.f32 %v259, %v483
  %485 = vdwg.mxu0
  %486 = vmatpush.bf16.msra.mxu0 %v420
  %487 = vmatpush.bf16.msra.mxu0 %v419
  %488 = vmatpush.bf16.msra.mxu0 %v418
  %489 = vmatpush.bf16.msra.mxu0 %v417
  %490 = vmatpush.bf16.msra.mxu0 %v416
  %491 = vmatpush.bf16.msra.mxu0 %v415
  %492 = vmatpush.bf16.msra.mxu0 %v414
  %493 = vmatpush.bf16.msra.mxu0 %v413
  %494 = vmatmul.bf16.gmra.mxu0 %v310
  %v495 = vpop.f32.mrf.mxu0
  %v496 = vadd.f32 %v447, %v495
  %v497 = vpop.f32.mrf.mxu0
  %v498 = vadd.f32 %v449, %v497
  %499 = vmatmul.bf16.gmra.mxu0 %v312
  %v500 = vpop.f32.mrf.mxu0
  %v501 = vadd.f32 %v452, %v500
  %v502 = vpop.f32.mrf.mxu0
  %v503 = vadd.f32 %v454, %v502
  %504 = vmatmul.bf16.gmra.mxu0 %v314
  %v505 = vpop.f32.mrf.mxu0
  %v506 = vadd.f32 %v457, %v505
  %v507 = vpop.f32.mrf.mxu0
  %v508 = vadd.f32 %v459, %v507
  %509 = vmatmul.bf16.gmra.mxu0 %v316
  %v510 = vpop.f32.mrf.mxu0
  %v511 = vadd.f32 %v462, %v510
  %v512 = vpop.f32.mrf.mxu0
  %v513 = vadd.f32 %v464, %v512
  %514 = vmatmul.bf16.gmra.mxu0 %v318
  %v515 = vpop.f32.mrf.mxu0
  %v516 = vadd.f32 %v467, %v515
  %v517 = vpop.f32.mrf.mxu0
  %v518 = vadd.f32 %v469, %v517
  %519 = vmatmul.bf16.gmra.mxu0 %v320
  %v520 = vpop.f32.mrf.mxu0
  %v521 = vadd.f32 %v472, %v520
  %v522 = vpop.f32.mrf.mxu0
  %v523 = vadd.f32 %v474, %v522
  %524 = vmatmul.bf16.gmra.mxu0 %v322
  %v525 = vpop.f32.mrf.mxu0
  %v526 = vadd.f32 %v477, %v525
  %v527 = vpop.f32.mrf.mxu0
  %v528 = vadd.f32 %v479, %v527
  %529 = vmatmul.bf16.gmra.mxu0 %v324
  %v530 = vpop.f32.mrf.mxu0
  %v531 = vadd.f32 %v482, %v530
  %v532 = vpop.f32.mrf.mxu0
  %v533 = vadd.f32 %v484, %v532
  %534 = vdwg.mxu0
  %535 = vst [vmem:[%s7 + $0x8] sm:$0xff] %v496
  %536 = vst [vmem:[%s7 + $0x20] sm:$0xff] %v498
  %537 = vst [vmem:[%s7 + $0x38] sm:$0xff] %v501
  %538 = vst [vmem:[%s7 + $0x50] sm:$0xff] %v503
  %539 = vst [vmem:[%s7 + $0x68] sm:$0xff] %v506
  %540 = vst [vmem:[%s7 + $0x80] sm:$0xff] %v508
  %541 = vst [vmem:[%s7 + $0x98] sm:$0xff] %v511
  %542 = vst [vmem:[%s7 + $0xb0] sm:$0xff] %v513
  %543 = vst [vmem:[%s7 + $0xc8] sm:$0xff] %v516
  %544 = vst [vmem:[%s7 + $0xe0] sm:$0xff] %v518
  %545 = vst [vmem:[%s7 + $0xf8] sm:$0xff] %v521
  %546 = vst [vmem:[%s7 + $0x110] sm:$0xff] %v523
  %547 = vst [vmem:[%s7 + $0x128] sm:$0xff] %v526
  %548 = vst [vmem:[%s7 + $0x140] sm:$0xff] %v528
  %549 = vst [vmem:[%s7 + $0x158] sm:$0xff] %v531
  %550 = vst [vmem:[%s7 + $0x170] sm:$0xff] %v533
  %v551 = vld [vmem:[%s2] sm:$0xff]
  %v552 = vld [vmem:[%s2 + $0x8] sm:$0xff]
  %v553 = vld [vmem:[%s2 + $0x10] sm:$0xff]
  %v554 = vld [vmem:[%s2 + $0x18] sm:$0xff]
  %v555 = vld [vmem:[%s2 + $0x20] sm:$0xff]
  %v556 = vld [vmem:[%s2 + $0x28] sm:$0xff]
  %v557 = vld [vmem:[%s2 + $0x30] sm:$0xff]
  %v558 = vld [vmem:[%s2 + $0x38] sm:$0xff]
  %v559 = vld [vmem:[%s2 + $0x40] sm:$0xff]
  %v560 = vld [vmem:[%s2 + $0x48] sm:$0xff]
  %v561 = vld [vmem:[%s2 + $0x50] sm:$0xff]
  %v562 = vld [vmem:[%s2 + $0x58] sm:$0xff]
  %v563 = vld [vmem:[%s2 + $0x60] sm:$0xff]
  %v564 = vld [vmem:[%s2 + $0x68] sm:$0xff]
  %v565 = vld [vmem:[%s2 + $0x70] sm:$0xff]
  %v566 = vld [vmem:[%s2 + $0x78] sm:$0xff]
  %v567 = vld [vmem:[%s2 + $0x80] sm:$0xff]
  %v568 = vld [vmem:[%s2 + $0x88] sm:$0xff]
  %v569 = vld [vmem:[%s2 + $0x90] sm:$0xff]
  %v570 = vld [vmem:[%s2 + $0x98] sm:$0xff]
  %v571 = vld [vmem:[%s2 + $0xa0] sm:$0xff]
  %v572 = vld [vmem:[%s2 + $0xa8] sm:$0xff]
  %v573 = vld [vmem:[%s2 + $0xb0] sm:$0xff]
  %v574 = vld [vmem:[%s2 + $0xb8] sm:$0xff]
  %v575 = vld [vmem:[%s2 + $0xc0] sm:$0xff]
  %v576 = vld [vmem:[%s2 + $0xc8] sm:$0xff]
  %v577 = vld [vmem:[%s2 + $0xd0] sm:$0xff]
  %v578 = vld [vmem:[%s2 + $0xd8] sm:$0xff]
  %v579 = vld [vmem:[%s2 + $0xe0] sm:$0xff]
  %v580 = vld [vmem:[%s2 + $0xe8] sm:$0xff]
  %v581 = vld [vmem:[%s2 + $0xf0] sm:$0xff]
  %v582 = vld [vmem:[%s2 + $0xf8] sm:$0xff]
  %v583 = vld [vmem:[%s2 + $0x100] sm:$0xff]
  %v584 = vld [vmem:[%s2 + $0x108] sm:$0xff]
  %v585 = vld [vmem:[%s2 + $0x110] sm:$0xff]
  %v586 = vld [vmem:[%s2 + $0x118] sm:$0xff]
  %v587 = vld [vmem:[%s2 + $0x120] sm:$0xff]
  %v588 = vld [vmem:[%s2 + $0x128] sm:$0xff]
  %v589 = vld [vmem:[%s2 + $0x130] sm:$0xff]
  %v590 = vld [vmem:[%s2 + $0x138] sm:$0xff]
  %v591 = vld [vmem:[%s2 + $0x140] sm:$0xff]
  %v592 = vld [vmem:[%s2 + $0x148] sm:$0xff]
  %v593 = vld [vmem:[%s2 + $0x150] sm:$0xff]
  %v594 = vld [vmem:[%s2 + $0x158] sm:$0xff]
  %v595 = vld [vmem:[%s2 + $0x160] sm:$0xff]
  %v596 = vld [vmem:[%s2 + $0x168] sm:$0xff]
  %v597 = vld [vmem:[%s2 + $0x170] sm:$0xff]
  %v598 = vld [vmem:[%s2 + $0x178] sm:$0xff]
  %v599 = vld [vmem:[%s2 + $0x180] sm:$0xff]
  %v600 = vld [vmem:[%s2 + $0x188] sm:$0xff]
  %v601 = vld [vmem:[%s2 + $0x190] sm:$0xff]
  %v602 = vld [vmem:[%s2 + $0x198] sm:$0xff]
  %v603 = vld [vmem:[%s2 + $0x1a0] sm:$0xff]
  %v604 = vld [vmem:[%s2 + $0x1a8] sm:$0xff]
  %v605 = vld [vmem:[%s2 + $0x1b0] sm:$0xff]
  %v606 = vld [vmem:[%s2 + $0x1b8] sm:$0xff]
  %v607 = vld [vmem:[%s2 + $0x1c0] sm:$0xff]
  %v608 = vld [vmem:[%s2 + $0x1c8] sm:$0xff]
  %v609 = vld [vmem:[%s2 + $0x1d0] sm:$0xff]
  %v610 = vld [vmem:[%s2 + $0x1d8] sm:$0xff]
  %v611 = vld [vmem:[%s2 + $0x1e0] sm:$0xff]
  %v612 = vld [vmem:[%s2 + $0x1e8] sm:$0xff]
  %v613 = vld [vmem:[%s2 + $0x1f0] sm:$0xff]
  %v614 = vld [vmem:[%s2 + $0x1f8] sm:$0xff]
  %v615 = vld [vmem:[%s5] sm:$0xf]
  %v616 = vld [vmem:[%s5 + $0x4] sm:$0xf]
  %v617 = vld [vmem:[%s5 + $0x8] sm:$0xf]
  %v618 = vld [vmem:[%s5 + $0xc] sm:$0xf]
  %v619 = vld [vmem:[%s5 + $0x10] sm:$0xf]
  %v620 = vld [vmem:[%s5 + $0x14] sm:$0xf]
  %v621 = vld [vmem:[%s5 + $0x18] sm:$0xf]
  %v622 = vld [vmem:[%s5 + $0x1c] sm:$0xf]
  %v623 = vld [vmem:[%s5 + $0x20] sm:$0xf]
  %v624 = vld [vmem:[%s5 + $0x24] sm:$0xf]
  %v625 = vld [vmem:[%s5 + $0x28] sm:$0xf]
  %v626 = vld [vmem:[%s5 + $0x2c] sm:$0xf]
  %v627 = vld [vmem:[%s5 + $0x30] sm:$0xf]
  %v628 = vld [vmem:[%s5 + $0x34] sm:$0xf]
  %v629 = vld [vmem:[%s5 + $0x38] sm:$0xf]
  %v630 = vld [vmem:[%s5 + $0x3c] sm:$0xf]
  %v631 = vld [vmem:[%s5 + $0x40] sm:$0xf]
  %v632 = vld [vmem:[%s5 + $0x44] sm:$0xf]
  %v633 = vld [vmem:[%s5 + $0x48] sm:$0xf]
  %v634 = vld [vmem:[%s5 + $0x4c] sm:$0xf]
  %v635 = vld [vmem:[%s5 + $0x50] sm:$0xf]
  %v636 = vld [vmem:[%s5 + $0x54] sm:$0xf]
  %v637 = vld [vmem:[%s5 + $0x58] sm:$0xf]
  %v638 = vld [vmem:[%s5 + $0x5c] sm:$0xf]
  %v639 = vld [vmem:[%s5 + $0x60] sm:$0xf]
  %v640 = vld [vmem:[%s5 + $0x64] sm:$0xf]
  %v641 = vld [vmem:[%s5 + $0x68] sm:$0xf]
  %v642 = vld [vmem:[%s5 + $0x6c] sm:$0xf]
  %v643 = vld [vmem:[%s5 + $0x70] sm:$0xf]
  %v644 = vld [vmem:[%s5 + $0x74] sm:$0xf]
  %v645 = vld [vmem:[%s5 + $0x78] sm:$0xf]
  %v646 = vld [vmem:[%s5 + $0x7c] sm:$0xf]
  %v647 = vld [vmem:[%s5 + $0x80] sm:$0xf]
  %v648 = vld [vmem:[%s5 + $0x84] sm:$0xf]
  %v649 = vld [vmem:[%s5 + $0x88] sm:$0xf]
  %v650 = vld [vmem:[%s5 + $0x8c] sm:$0xf]
  %v651 = vld [vmem:[%s5 + $0x90] sm:$0xf]
  %v652 = vld [vmem:[%s5 + $0x94] sm:$0xf]
  %v653 = vld [vmem:[%s5 + $0x98] sm:$0xf]
  %v654 = vld [vmem:[%s5 + $0x9c] sm:$0xf]
  %v655 = vld [vmem:[%s5 + $0xa0] sm:$0xf]
  %v656 = vld [vmem:[%s5 + $0xa4] sm:$0xf]
  %v657 = vld [vmem:[%s5 + $0xa8] sm:$0xf]
  %v658 = vld [vmem:[%s5 + $0xac] sm:$0xf]
  %v659 = vld [vmem:[%s5 + $0xb0] sm:$0xf]
  %v660 = vld [vmem:[%s5 + $0xb4] sm:$0xf]
  %v661 = vld [vmem:[%s5 + $0xb8] sm:$0xf]
  %v662 = vld [vmem:[%s5 + $0xbc] sm:$0xf]
  %v663 = vld [vmem:[%s5 + $0xc0] sm:$0xf]
  %v664 = vld [vmem:[%s5 + $0xc4] sm:$0xf]
  %v665 = vld [vmem:[%s5 + $0xc8] sm:$0xf]
  %v666 = vld [vmem:[%s5 + $0xcc] sm:$0xf]
  %v667 = vld [vmem:[%s5 + $0xd0] sm:$0xf]
  %v668 = vld [vmem:[%s5 + $0xd4] sm:$0xf]
  %v669 = vld [vmem:[%s5 + $0xd8] sm:$0xf]
  %v670 = vld [vmem:[%s5 + $0xdc] sm:$0xf]
  %v671 = vld [vmem:[%s5 + $0xe0] sm:$0xf]
  %v672 = vld [vmem:[%s5 + $0xe4] sm:$0xf]
  %v673 = vld [vmem:[%s5 + $0xe8] sm:$0xf]
  %v674 = vld [vmem:[%s5 + $0xec] sm:$0xf]
  %v675 = vld [vmem:[%s5 + $0xf0] sm:$0xf]
  %v676 = vld [vmem:[%s5 + $0xf4] sm:$0xf]
  %v677 = vld [vmem:[%s5 + $0xf8] sm:$0xf]
  %v678 = vld [vmem:[%s5 + $0xfc] sm:$0xf]
  %v679 = vld [vmem:[%s5 + $0x100] sm:$0xf]
  %v680 = vld [vmem:[%s5 + $0x104] sm:$0xf]
  %v681 = vld [vmem:[%s5 + $0x108] sm:$0xf]
  %v682 = vld [vmem:[%s5 + $0x10c] sm:$0xf]
  %v683 = vld [vmem:[%s5 + $0x110] sm:$0xf]
  %v684 = vld [vmem:[%s5 + $0x114] sm:$0xf]
  %v685 = vld [vmem:[%s5 + $0x118] sm:$0xf]
  %v686 = vld [vmem:[%s5 + $0x11c] sm:$0xf]
  %v687 = vld [vmem:[%s5 + $0x120] sm:$0xf]
  %v688 = vld [vmem:[%s5 + $0x124] sm:$0xf]
  %v689 = vld [vmem:[%s5 + $0x128] sm:$0xf]
  %v690 = vld [vmem:[%s5 + $0x12c] sm:$0xf]
  %v691 = vld [vmem:[%s5 + $0x130] sm:$0xf]
  %v692 = vld [vmem:[%s5 + $0x134] sm:$0xf]
  %v693 = vld [vmem:[%s5 + $0x138] sm:$0xf]
  %v694 = vld [vmem:[%s5 + $0x13c] sm:$0xf]
  %v695 = vld [vmem:[%s5 + $0x140] sm:$0xf]
  %v696 = vld [vmem:[%s5 + $0x144] sm:$0xf]
  %v697 = vld [vmem:[%s5 + $0x148] sm:$0xf]
  %v698 = vld [vmem:[%s5 + $0x14c] sm:$0xf]
  %v699 = vld [vmem:[%s5 + $0x150] sm:$0xf]
  %v700 = vld [vmem:[%s5 + $0x154] sm:$0xf]
  %v701 = vld [vmem:[%s5 + $0x158] sm:$0xf]
  %v702 = vld [vmem:[%s5 + $0x15c] sm:$0xf]
  %v703 = vld [vmem:[%s5 + $0x160] sm:$0xf]
  %v704 = vld [vmem:[%s5 + $0x164] sm:$0xf]
  %v705 = vld [vmem:[%s5 + $0x168] sm:$0xf]
  %v706 = vld [vmem:[%s5 + $0x16c] sm:$0xf]
  %v707 = vld [vmem:[%s5 + $0x170] sm:$0xf]
  %v708 = vld [vmem:[%s5 + $0x174] sm:$0xf]
  %v709 = vld [vmem:[%s5 + $0x178] sm:$0xf]
  %v710 = vld [vmem:[%s5 + $0x17c] sm:$0xf]
  %v711 = vld [vmem:[%s5 + $0x180] sm:$0xf]
  %v712 = vld [vmem:[%s5 + $0x184] sm:$0xf]
  %v713 = vld [vmem:[%s5 + $0x188] sm:$0xf]
  %v714 = vld [vmem:[%s5 + $0x18c] sm:$0xf]
  %v715 = vld [vmem:[%s5 + $0x190] sm:$0xf]
  %v716 = vld [vmem:[%s5 + $0x194] sm:$0xf]
  %v717 = vld [vmem:[%s5 + $0x198] sm:$0xf]
  %v718 = vld [vmem:[%s5 + $0x19c] sm:$0xf]
  %v719 = vld [vmem:[%s5 + $0x1a0] sm:$0xf]
  %v720 = vld [vmem:[%s5 + $0x1a4] sm:$0xf]
  %v721 = vld [vmem:[%s5 + $0x1a8] sm:$0xf]
  %v722 = vld [vmem:[%s5 + $0x1ac] sm:$0xf]
  %v723 = vld [vmem:[%s5 + $0x1b0] sm:$0xf]
  %v724 = vld [vmem:[%s5 + $0x1b4] sm:$0xf]
  %v725 = vld [vmem:[%s5 + $0x1b8] sm:$0xf]
  %v726 = vld [vmem:[%s5 + $0x1bc] sm:$0xf]
  %v727 = vld [vmem:[%s5 + $0x1c0] sm:$0xf]
  %v728 = vld [vmem:[%s5 + $0x1c4] sm:$0xf]
  %v729 = vld [vmem:[%s5 + $0x1c8] sm:$0xf]
  %v730 = vld [vmem:[%s5 + $0x1cc] sm:$0xf]
  %v731 = vld [vmem:[%s5 + $0x1d0] sm:$0xf]
  %v732 = vld [vmem:[%s5 + $0x1d4] sm:$0xf]
  %v733 = vld [vmem:[%s5 + $0x1d8] sm:$0xf]
  %v734 = vld [vmem:[%s5 + $0x1dc] sm:$0xf]
  %v735 = vld [vmem:[%s5 + $0x1e0] sm:$0xf]
  %v736 = vld [vmem:[%s5 + $0x1e4] sm:$0xf]
  %v737 = vld [vmem:[%s5 + $0x1e8] sm:$0xf]
  %v738 = vld [vmem:[%s5 + $0x1ec] sm:$0xf]
  %v739 = vld [vmem:[%s5 + $0x1f0] sm:$0xf]
  %v740 = vld [vmem:[%s5 + $0x1f4] sm:$0xf]
  %v741 = vld [vmem:[%s5 + $0x1f8] sm:$0xf]
  %v742 = vld [vmem:[%s5 + $0x1fc] sm:$0xf]
  %v743 = vld [vmem:[%s6 + $0x2] sm:$0x1]
  %v745 = vperm.slane %v743, 0
  %v811 = vunpack.c.l.b16 %v551
  %v812 = vunpack.c.h.b16 %v551
  %v813 = vunpack.c.l.b16 %v552
  %v814 = vunpack.c.h.b16 %v552
  %v815 = vunpack.c.l.b16 %v553
  %v816 = vunpack.c.h.b16 %v553
  %v817 = vunpack.c.l.b16 %v554
  %v818 = vunpack.c.h.b16 %v554
  %v819 = vunpack.c.l.b16 %v555
  %v820 = vunpack.c.h.b16 %v555
  %v821 = vunpack.c.l.b16 %v556
  %v822 = vunpack.c.h.b16 %v556
  %v823 = vunpack.c.l.b16 %v557
  %v824 = vunpack.c.h.b16 %v557
  %v825 = vunpack.c.l.b16 %v558
  %v826 = vunpack.c.h.b16 %v558
  %v827 = vunpack.c.l.b16 %v559
  %v828 = vunpack.c.h.b16 %v559
  %v829 = vunpack.c.l.b16 %v560
  %v830 = vunpack.c.h.b16 %v560
  %v831 = vunpack.c.l.b16 %v561
  %v832 = vunpack.c.h.b16 %v561
  %v833 = vunpack.c.l.b16 %v562
  %v834 = vunpack.c.h.b16 %v562
  %v835 = vunpack.c.l.b16 %v563
  %v836 = vunpack.c.h.b16 %v563
  %v837 = vunpack.c.l.b16 %v564
  %v838 = vunpack.c.h.b16 %v564
  %v839 = vunpack.c.l.b16 %v565
  %v840 = vunpack.c.h.b16 %v565
  %v841 = vunpack.c.l.b16 %v566
  %v842 = vunpack.c.h.b16 %v566
  %v843 = vunpack.c.l.b16 %v567
  %v844 = vunpack.c.h.b16 %v567
  %v845 = vunpack.c.l.b16 %v568
  %v846 = vunpack.c.h.b16 %v568
  %v847 = vunpack.c.l.b16 %v569
  %v848 = vunpack.c.h.b16 %v569
  %v849 = vunpack.c.l.b16 %v570
  %v850 = vunpack.c.h.b16 %v570
  %v851 = vunpack.c.l.b16 %v571
  %v852 = vunpack.c.h.b16 %v571
  %v853 = vunpack.c.l.b16 %v572
  %v854 = vunpack.c.h.b16 %v572
  %v855 = vunpack.c.l.b16 %v573
  %v856 = vunpack.c.h.b16 %v573
  %v857 = vunpack.c.l.b16 %v574
  %v858 = vunpack.c.h.b16 %v574
  %v859 = vunpack.c.l.b16 %v575
  %v860 = vunpack.c.h.b16 %v575
  %v861 = vunpack.c.l.b16 %v576
  %v862 = vunpack.c.h.b16 %v576
  %v863 = vunpack.c.l.b16 %v577
  %v864 = vunpack.c.h.b16 %v577
  %v865 = vunpack.c.l.b16 %v578
  %v866 = vunpack.c.h.b16 %v578
  %v867 = vunpack.c.l.b16 %v579
  %v868 = vunpack.c.h.b16 %v579
  %v869 = vunpack.c.l.b16 %v580
  %v870 = vunpack.c.h.b16 %v580
  %v871 = vunpack.c.l.b16 %v581
  %v872 = vunpack.c.h.b16 %v581
  %v873 = vunpack.c.l.b16 %v582
  %v874 = vunpack.c.h.b16 %v582
  %v875 = vunpack.c.l.b16 %v583
  %v876 = vunpack.c.h.b16 %v583
  %v877 = vunpack.c.l.b16 %v584
  %v878 = vunpack.c.h.b16 %v584
  %v879 = vunpack.c.l.b16 %v585
  %v880 = vunpack.c.h.b16 %v585
  %v881 = vunpack.c.l.b16 %v586
  %v882 = vunpack.c.h.b16 %v586
  %v883 = vunpack.c.l.b16 %v587
  %v884 = vunpack.c.h.b16 %v587
  %v885 = vunpack.c.l.b16 %v588
  %v886 = vunpack.c.h.b16 %v588
  %v887 = vunpack.c.l.b16 %v589
  %v888 = vunpack.c.h.b16 %v589
  %v889 = vunpack.c.l.b16 %v590
  %v890 = vunpack.c.h.b16 %v590
  %v891 = vunpack.c.l.b16 %v591
  %v892 = vunpack.c.h.b16 %v591
  %v893 = vunpack.c.l.b16 %v592
  %v894 = vunpack.c.h.b16 %v592
  %v895 = vunpack.c.l.b16 %v593
  %v896 = vunpack.c.h.b16 %v593
  %v897 = vunpack.c.l.b16 %v594
  %v898 = vunpack.c.h.b16 %v594
  %v899 = vunpack.c.l.b16 %v595
  %v900 = vunpack.c.h.b16 %v595
  %v901 = vunpack.c.l.b16 %v596
  %v902 = vunpack.c.h.b16 %v596
  %v903 = vunpack.c.l.b16 %v597
  %v904 = vunpack.c.h.b16 %v597
  %v905 = vunpack.c.l.b16 %v598
  %v906 = vunpack.c.h.b16 %v598
  %v907 = vunpack.c.l.b16 %v599
  %v908 = vunpack.c.h.b16 %v599
  %v909 = vunpack.c.l.b16 %v600
  %v910 = vunpack.c.h.b16 %v600
  %v911 = vunpack.c.l.b16 %v601
  %v912 = vunpack.c.h.b16 %v601
  %v913 = vunpack.c.l.b16 %v602
  %v914 = vunpack.c.h.b16 %v602
  %v915 = vunpack.c.l.b16 %v603
  %v916 = vunpack.c.h.b16 %v603
  %v917 = vunpack.c.l.b16 %v604
  %v918 = vunpack.c.h.b16 %v604
  %v919 = vunpack.c.l.b16 %v605
  %v920 = vunpack.c.h.b16 %v605
  %v921 = vunpack.c.l.b16 %v606
  %v922 = vunpack.c.h.b16 %v606
  %v923 = vunpack.c.l.b16 %v607
  %v924 = vunpack.c.h.b16 %v607
  %v925 = vunpack.c.l.b16 %v608
  %v926 = vunpack.c.h.b16 %v608
  %v927 = vunpack.c.l.b16 %v609
  %v928 = vunpack.c.h.b16 %v609
  %v929 = vunpack.c.l.b16 %v610
  %v930 = vunpack.c.h.b16 %v610
  %v931 = vunpack.c.l.b16 %v611
  %v932 = vunpack.c.h.b16 %v611
  %v933 = vunpack.c.l.b16 %v612
  %v934 = vunpack.c.h.b16 %v612
  %v935 = vunpack.c.l.b16 %v613
  %v936 = vunpack.c.h.b16 %v613
  %v937 = vunpack.c.l.b16 %v614
  %v938 = vunpack.c.h.b16 %v614
  %v939 = vpack.c.b16 %v819, %v811
  %v940 = vpack.c.b16 %v820, %v812
  %v941 = vpack.c.b16 %v821, %v813
  %v942 = vpack.c.b16 %v822, %v814
  %v943 = vpack.c.b16 %v823, %v815
  %v944 = vpack.c.b16 %v824, %v816
  %v945 = vpack.c.b16 %v825, %v817
  %v946 = vpack.c.b16 %v826, %v818
  %v947 = vpack.c.b16 %v835, %v827
  %v948 = vpack.c.b16 %v836, %v828
  %v949 = vpack.c.b16 %v837, %v829
  %v950 = vpack.c.b16 %v838, %v830
  %v951 = vpack.c.b16 %v839, %v831
  %v952 = vpack.c.b16 %v840, %v832
  %v953 = vpack.c.b16 %v841, %v833
  %v954 = vpack.c.b16 %v842, %v834
  %v955 = vpack.c.b16 %v851, %v843
  %v956 = vpack.c.b16 %v852, %v844
  %v957 = vpack.c.b16 %v853, %v845
  %v958 = vpack.c.b16 %v854, %v846
  %v959 = vpack.c.b16 %v855, %v847
  %v960 = vpack.c.b16 %v856, %v848
  %v961 = vpack.c.b16 %v857, %v849
  %v962 = vpack.c.b16 %v858, %v850
  %v963 = vpack.c.b16 %v867, %v859
  %v964 = vpack.c.b16 %v868, %v860
  %v965 = vpack.c.b16 %v869, %v861
  %v966 = vpack.c.b16 %v870, %v862
  %v967 = vpack.c.b16 %v871, %v863
  %v968 = vpack.c.b16 %v872, %v864
  %v969 = vpack.c.b16 %v873, %v865
  %v970 = vpack.c.b16 %v874, %v866
  %v971 = vpack.c.b16 %v883, %v875
  %v972 = vpack.c.b16 %v884, %v876
  %v973 = vpack.c.b16 %v885, %v877
  %v974 = vpack.c.b16 %v886, %v878
  %v975 = vpack.c.b16 %v887, %v879
  %v976 = vpack.c.b16 %v888, %v880
  %v977 = vpack.c.b16 %v889, %v881
  %v978 = vpack.c.b16 %v890, %v882
  %v979 = vpack.c.b16 %v899, %v891
  %v980 = vpack.c.b16 %v900, %v892
  %v981 = vpack.c.b16 %v901, %v893
  %v982 = vpack.c.b16 %v902, %v894
  %v983 = vpack.c.b16 %v903, %v895
  %v984 = vpack.c.b16 %v904, %v896
  %v985 = vpack.c.b16 %v905, %v897
  %v986 = vpack.c.b16 %v906, %v898
  %v987 = vpack.c.b16 %v915, %v907
  %v988 = vpack.c.b16 %v916, %v908
  %v989 = vpack.c.b16 %v917, %v909
  %v990 = vpack.c.b16 %v918, %v910
  %v991 = vpack.c.b16 %v919, %v911
  %v992 = vpack.c.b16 %v920, %v912
  %v993 = vpack.c.b16 %v921, %v913
  %v994 = vpack.c.b16 %v922, %v914
  %v995 = vpack.c.b16 %v931, %v923
  %v996 = vpack.c.b16 %v932, %v924
  %v997 = vpack.c.b16 %v933, %v925
  %v998 = vpack.c.b16 %v934, %v926
  %v999 = vpack.c.b16 %v935, %v927
  %v1000 = vpack.c.b16 %v936, %v928
  %v1001 = vpack.c.b16 %v937, %v929
  %v1002 = vpack.c.b16 %v938, %v930
  %v1195 = vunpack.c.l.b16 %v615
  %v1196 = vunpack.c.l.b16 %v616
  %v1197 = vunpack.c.l.b16 %v617
  %v1198 = vunpack.c.l.b16 %v618
  %v1199 = vunpack.c.l.b16 %v619
  %v1200 = vunpack.c.l.b16 %v620
  %v1201 = vunpack.c.l.b16 %v621
  %v1202 = vunpack.c.l.b16 %v622
  %v1203 = vunpack.c.l.b16 %v623
  %v1204 = vunpack.c.l.b16 %v624
  %v1205 = vunpack.c.l.b16 %v625
  %v1206 = vunpack.c.l.b16 %v626
  %v1207 = vunpack.c.l.b16 %v627
  %v1208 = vunpack.c.l.b16 %v628
  %v1209 = vunpack.c.l.b16 %v629
  %v1210 = vunpack.c.l.b16 %v630
  %v1211 = vunpack.c.l.b16 %v631
  %v1212 = vunpack.c.l.b16 %v632
  %v1213 = vunpack.c.l.b16 %v633
  %v1214 = vunpack.c.l.b16 %v634
  %v1215 = vunpack.c.l.b16 %v635
  %v1216 = vunpack.c.l.b16 %v636
  %v1217 = vunpack.c.l.b16 %v637
  %v1218 = vunpack.c.l.b16 %v638
  %v1219 = vunpack.c.l.b16 %v639
  %v1220 = vunpack.c.l.b16 %v640
  %v1221 = vunpack.c.l.b16 %v641
  %v1222 = vunpack.c.l.b16 %v642
  %v1223 = vunpack.c.l.b16 %v643
  %v1224 = vunpack.c.l.b16 %v644
  %v1225 = vunpack.c.l.b16 %v645
  %v1226 = vunpack.c.l.b16 %v646
  %v1227 = vunpack.c.l.b16 %v647
  %v1228 = vunpack.c.l.b16 %v648
  %v1229 = vunpack.c.l.b16 %v649
  %v1230 = vunpack.c.l.b16 %v650
  %v1231 = vunpack.c.l.b16 %v651
  %v1232 = vunpack.c.l.b16 %v652
  %v1233 = vunpack.c.l.b16 %v653
  %v1234 = vunpack.c.l.b16 %v654
  %v1235 = vunpack.c.l.b16 %v655
  %v1236 = vunpack.c.l.b16 %v656
  %v1237 = vunpack.c.l.b16 %v657
  %v1238 = vunpack.c.l.b16 %v658
  %v1239 = vunpack.c.l.b16 %v659
  %v1240 = vunpack.c.l.b16 %v660
  %v1241 = vunpack.c.l.b16 %v661
  %v1242 = vunpack.c.l.b16 %v662
  %v1243 = vunpack.c.l.b16 %v663
  %v1244 = vunpack.c.l.b16 %v664
  %v1245 = vunpack.c.l.b16 %v665
  %v1246 = vunpack.c.l.b16 %v666
  %v1247 = vunpack.c.l.b16 %v667
  %v1248 = vunpack.c.l.b16 %v668
  %v1249 = vunpack.c.l.b16 %v669
  %v1250 = vunpack.c.l.b16 %v670
  %v1251 = vunpack.c.l.b16 %v671
  %v1252 = vunpack.c.l.b16 %v672
  %v1253 = vunpack.c.l.b16 %v673
  %v1254 = vunpack.c.l.b16 %v674
  %v1255 = vunpack.c.l.b16 %v675
  %v1256 = vunpack.c.l.b16 %v676
  %v1257 = vunpack.c.l.b16 %v677
  %v1258 = vunpack.c.l.b16 %v678
  %v1259 = vunpack.c.l.b16 %v679
  %v1260 = vunpack.c.l.b16 %v680
  %v1261 = vunpack.c.l.b16 %v681
  %v1262 = vunpack.c.l.b16 %v682
  %v1263 = vunpack.c.l.b16 %v683
  %v1264 = vunpack.c.l.b16 %v684
  %v1265 = vunpack.c.l.b16 %v685
  %v1266 = vunpack.c.l.b16 %v686
  %v1267 = vunpack.c.l.b16 %v687
  %v1268 = vunpack.c.l.b16 %v688
  %v1269 = vunpack.c.l.b16 %v689
  %v1270 = vunpack.c.l.b16 %v690
  %v1271 = vunpack.c.l.b16 %v691
  %v1272 = vunpack.c.l.b16 %v692
  %v1273 = vunpack.c.l.b16 %v693
  %v1274 = vunpack.c.l.b16 %v694
  %v1275 = vunpack.c.l.b16 %v695
  %v1276 = vunpack.c.l.b16 %v696
  %v1277 = vunpack.c.l.b16 %v697
  %v1278 = vunpack.c.l.b16 %v698
  %v1279 = vunpack.c.l.b16 %v699
  %v1280 = vunpack.c.l.b16 %v700
  %v1281 = vunpack.c.l.b16 %v701
  %v1282 = vunpack.c.l.b16 %v702
  %v1283 = vunpack.c.l.b16 %v703
  %v1284 = vunpack.c.l.b16 %v704
  %v1285 = vunpack.c.l.b16 %v705
  %v1286 = vunpack.c.l.b16 %v706
  %v1287 = vunpack.c.l.b16 %v707
  %v1288 = vunpack.c.l.b16 %v708
  %v1289 = vunpack.c.l.b16 %v709
  %v1290 = vunpack.c.l.b16 %v710
  %v1291 = vunpack.c.l.b16 %v711
  %v1292 = vunpack.c.l.b16 %v712
  %v1293 = vunpack.c.l.b16 %v713
  %v1294 = vunpack.c.l.b16 %v714
  %v1295 = vunpack.c.l.b16 %v715
  %v1296 = vunpack.c.l.b16 %v716
  %v1297 = vunpack.c.l.b16 %v717
  %v1298 = vunpack.c.l.b16 %v718
  %v1299 = vunpack.c.l.b16 %v719
  %v1300 = vunpack.c.l.b16 %v720
  %v1301 = vunpack.c.l.b16 %v721
  %v1302 = vunpack.c.l.b16 %v722
  %v1303 = vunpack.c.l.b16 %v723
  %v1304 = vunpack.c.l.b16 %v724
  %v1305 = vunpack.c.l.b16 %v725
  %v1306 = vunpack.c.l.b16 %v726
  %v1307 = vunpack.c.l.b16 %v727
  %v1308 = vunpack.c.l.b16 %v728
  %v1309 = vunpack.c.l.b16 %v729
  %v1310 = vunpack.c.l.b16 %v730
  %v1311 = vunpack.c.l.b16 %v731
  %v1312 = vunpack.c.l.b16 %v732
  %v1313 = vunpack.c.l.b16 %v733
  %v1314 = vunpack.c.l.b16 %v734
  %v1315 = vunpack.c.l.b16 %v735
  %v1316 = vunpack.c.l.b16 %v736
  %v1317 = vunpack.c.l.b16 %v737
  %v1318 = vunpack.c.l.b16 %v738
  %v1319 = vunpack.c.l.b16 %v739
  %v1320 = vunpack.c.l.b16 %v740
  %v1321 = vunpack.c.l.b16 %v741
  %v1322 = vunpack.c.l.b16 %v742
  %v1323 = vpack.c.b16 %v1196, %v1195
  %v1324 = vpack.c.b16 %v1198, %v1197
  %v1325 = vpack.c.b16 %v1200, %v1199
  %v1326 = vpack.c.b16 %v1202, %v1201
  %v1327 = vpack.c.b16 %v1204, %v1203
  %v1328 = vpack.c.b16 %v1206, %v1205
  %v1329 = vpack.c.b16 %v1208, %v1207
  %v1330 = vpack.c.b16 %v1210, %v1209
  %v1331 = vpack.c.b16 %v1212, %v1211
  %v1332 = vpack.c.b16 %v1214, %v1213
  %v1333 = vpack.c.b16 %v1216, %v1215
  %v1334 = vpack.c.b16 %v1218, %v1217
  %v1335 = vpack.c.b16 %v1220, %v1219
  %v1336 = vpack.c.b16 %v1222, %v1221
  %v1337 = vpack.c.b16 %v1224, %v1223
  %v1338 = vpack.c.b16 %v1226, %v1225
  %v1339 = vpack.c.b16 %v1228, %v1227
  %v1340 = vpack.c.b16 %v1230, %v1229
  %v1341 = vpack.c.b16 %v1232, %v1231
  %v1342 = vpack.c.b16 %v1234, %v1233
  %v1343 = vpack.c.b16 %v1236, %v1235
  %v1344 = vpack.c.b16 %v1238, %v1237
  %v1345 = vpack.c.b16 %v1240, %v1239
  %v1346 = vpack.c.b16 %v1242, %v1241
  %v1347 = vpack.c.b16 %v1244, %v1243
  %v1348 = vpack.c.b16 %v1246, %v1245
  %v1349 = vpack.c.b16 %v1248, %v1247
  %v1350 = vpack.c.b16 %v1250, %v1249
  %v1351 = vpack.c.b16 %v1252, %v1251
  %v1352 = vpack.c.b16 %v1254, %v1253
  %v1353 = vpack.c.b16 %v1256, %v1255
  %v1354 = vpack.c.b16 %v1258, %v1257
  %v1355 = vpack.c.b16 %v1260, %v1259
  %v1356 = vpack.c.b16 %v1262, %v1261
  %v1357 = vpack.c.b16 %v1264, %v1263
  %v1358 = vpack.c.b16 %v1266, %v1265
  %v1359 = vpack.c.b16 %v1268, %v1267
  %v1360 = vpack.c.b16 %v1270, %v1269
  %v1361 = vpack.c.b16 %v1272, %v1271
  %v1362 = vpack.c.b16 %v1274, %v1273
  %v1363 = vpack.c.b16 %v1276, %v1275
  %v1364 = vpack.c.b16 %v1278, %v1277
  %v1365 = vpack.c.b16 %v1280, %v1279
  %v1366 = vpack.c.b16 %v1282, %v1281
  %v1367 = vpack.c.b16 %v1284, %v1283
  %v1368 = vpack.c.b16 %v1286, %v1285
  %v1369 = vpack.c.b16 %v1288, %v1287
  %v1370 = vpack.c.b16 %v1290, %v1289
  %v1371 = vpack.c.b16 %v1292, %v1291
  %v1372 = vpack.c.b16 %v1294, %v1293
  %v1373 = vpack.c.b16 %v1296, %v1295
  %v1374 = vpack.c.b16 %v1298, %v1297
  %v1375 = vpack.c.b16 %v1300, %v1299
  %v1376 = vpack.c.b16 %v1302, %v1301
  %v1377 = vpack.c.b16 %v1304, %v1303
  %v1378 = vpack.c.b16 %v1306, %v1305
  %v1379 = vpack.c.b16 %v1308, %v1307
  %v1380 = vpack.c.b16 %v1310, %v1309
  %v1381 = vpack.c.b16 %v1312, %v1311
  %v1382 = vpack.c.b16 %v1314, %v1313
  %v1383 = vpack.c.b16 %v1316, %v1315
  %v1384 = vpack.c.b16 %v1318, %v1317
  %v1385 = vpack.c.b16 %v1320, %v1319
  %v1386 = vpack.c.b16 %v1322, %v1321
  %1451 = vmatpush.bf16.msra.mxu0 %v1330
  %1452 = vmatpush.bf16.msra.mxu0 %v1329
  %1453 = vmatpush.bf16.msra.mxu0 %v1328
  %1454 = vmatpush.bf16.msra.mxu0 %v1327
  %1455 = vmatpush.bf16.msra.mxu0 %v1326
  %1456 = vmatpush.bf16.msra.mxu0 %v1325
  %1457 = vmatpush.bf16.msra.mxu0 %v1324
  %1458 = vmatpush.bf16.msra.mxu0 %v1323
  %1459 = vmatmul.bf16.gmra.mxu0 %v939
  %v1460 = vpop.f32.mrf.mxu0
  %v1461 = vadd.f32 %v745, %v1460
  %v1462 = vpop.f32.mrf.mxu0
  %v1463 = vadd.f32 %v745, %v1462
  %1464 = vmatmul.bf16.gmra.mxu0 %v947
  %v1465 = vpop.f32.mrf.mxu0
  %v1466 = vadd.f32 %v745, %v1465
  %v1467 = vpop.f32.mrf.mxu0
  %v1468 = vadd.f32 %v745, %v1467
  %1469 = vmatmul.bf16.gmra.mxu0 %v955
  %v1470 = vpop.f32.mrf.mxu0
  %v1471 = vadd.f32 %v745, %v1470
  %v1472 = vpop.f32.mrf.mxu0
  %v1473 = vadd.f32 %v745, %v1472
  %1474 = vmatmul.bf16.gmra.mxu0 %v963
  %v1475 = vpop.f32.mrf.mxu0
  %v1476 = vadd.f32 %v745, %v1475
  %v1477 = vpop.f32.mrf.mxu0
  %v1478 = vadd.f32 %v745, %v1477
  %1479 = vmatmul.bf16.gmra.mxu0 %v971
  %v1480 = vpop.f32.mrf.mxu0
  %v1481 = vadd.f32 %v745, %v1480
  %v1482 = vpop.f32.mrf.mxu0
  %v1483 = vadd.f32 %v745, %v1482
  %1484 = vmatmul.bf16.gmra.mxu0 %v979
  %v1485 = vpop.f32.mrf.mxu0
  %v1486 = vadd.f32 %v745, %v1485
  %v1487 = vpop.f32.mrf.mxu0
  %v1488 = vadd.f32 %v745, %v1487
  %1489 = vmatmul.bf16.gmra.mxu0 %v987
  %v1490 = vpop.f32.mrf.mxu0
  %v1491 = vadd.f32 %v745, %v1490
  %v1492 = vpop.f32.mrf.mxu0
  %v1493 = vadd.f32 %v745, %v1492
  %1494 = vmatmul.bf16.gmra.mxu0 %v995
  %v1495 = vpop.f32.mrf.mxu0
  %v1496 = vadd.f32 %v745, %v1495
  %v1497 = vpop.f32.mrf.mxu0
  %v1498 = vadd.f32 %v745, %v1497
  %1499 = vdwg.mxu0
  %1500 = vmatpush.bf16.msra.mxu0 %v1338
  %1501 = vmatpush.bf16.msra.mxu0 %v1337
  %1502 = vmatpush.bf16.msra.mxu0 %v1336
  %1503 = vmatpush.bf16.msra.mxu0 %v1335
  %1504 = vmatpush.bf16.msra.mxu0 %v1334
  %1505 = vmatpush.bf16.msra.mxu0 %v1333
  %1506 = vmatpush.bf16.msra.mxu0 %v1332
  %1507 = vmatpush.bf16.msra.mxu0 %v1331
  %1508 = vmatmul.bf16.gmra.mxu0 %v940
  %v1509 = vpop.f32.mrf.mxu0
  %v1510 = vadd.f32 %v1461, %v1509
  %v1511 = vpop.f32.mrf.mxu0
  %v1512 = vadd.f32 %v1463, %v1511
  %1513 = vmatmul.bf16.gmra.mxu0 %v948
  %v1514 = vpop.f32.mrf.mxu0
  %v1515 = vadd.f32 %v1466, %v1514
  %v1516 = vpop.f32.mrf.mxu0
  %v1517 = vadd.f32 %v1468, %v1516
  %1518 = vmatmul.bf16.gmra.mxu0 %v956
  %v1519 = vpop.f32.mrf.mxu0
  %v1520 = vadd.f32 %v1471, %v1519
  %v1521 = vpop.f32.mrf.mxu0
  %v1522 = vadd.f32 %v1473, %v1521
  %1523 = vmatmul.bf16.gmra.mxu0 %v964
  %v1524 = vpop.f32.mrf.mxu0
  %v1525 = vadd.f32 %v1476, %v1524
  %v1526 = vpop.f32.mrf.mxu0
  %v1527 = vadd.f32 %v1478, %v1526
  %1528 = vmatmul.bf16.gmra.mxu0 %v972
  %v1529 = vpop.f32.mrf.mxu0
  %v1530 = vadd.f32 %v1481, %v1529
  %v1531 = vpop.f32.mrf.mxu0
  %v1532 = vadd.f32 %v1483, %v1531
  %1533 = vmatmul.bf16.gmra.mxu0 %v980
  %v1534 = vpop.f32.mrf.mxu0
  %v1535 = vadd.f32 %v1486, %v1534
  %v1536 = vpop.f32.mrf.mxu0
  %v1537 = vadd.f32 %v1488, %v1536
  %1538 = vmatmul.bf16.gmra.mxu0 %v988
  %v1539 = vpop.f32.mrf.mxu0
  %v1540 = vadd.f32 %v1491, %v1539
  %v1541 = vpop.f32.mrf.mxu0
  %v1542 = vadd.f32 %v1493, %v1541
  %1543 = vmatmul.bf16.gmra.mxu0 %v996
  %v1544 = vpop.f32.mrf.mxu0
  %v1545 = vadd.f32 %v1496, %v1544
  %v1546 = vpop.f32.mrf.mxu0
  %v1547 = vadd.f32 %v1498, %v1546
  %1548 = vdwg.mxu0
  %1549 = vmatpush.bf16.msra.mxu0 %v1346
  %1550 = vmatpush.bf16.msra.mxu0 %v1345
  %1551 = vmatpush.bf16.msra.mxu0 %v1344
  %1552 = vmatpush.bf16.msra.mxu0 %v1343
  %1553 = vmatpush.bf16.msra.mxu0 %v1342
  %1554 = vmatpush.bf16.msra.mxu0 %v1341
  %1555 = vmatpush.bf16.msra.mxu0 %v1340
  %1556 = vmatpush.bf16.msra.mxu0 %v1339
  %1557 = vmatmul.bf16.gmra.mxu0 %v941
  %v1558 = vpop.f32.mrf.mxu0
  %v1559 = vadd.f32 %v1510, %v1558
  %v1560 = vpop.f32.mrf.mxu0
  %v1561 = vadd.f32 %v1512, %v1560
  %1562 = vmatmul.bf16.gmra.mxu0 %v949
  %v1563 = vpop.f32.mrf.mxu0
  %v1564 = vadd.f32 %v1515, %v1563
  %v1565 = vpop.f32.mrf.mxu0
  %v1566 = vadd.f32 %v1517, %v1565
  %1567 = vmatmul.bf16.gmra.mxu0 %v957
  %v1568 = vpop.f32.mrf.mxu0
  %v1569 = vadd.f32 %v1520, %v1568
  %v1570 = vpop.f32.mrf.mxu0
  %v1571 = vadd.f32 %v1522, %v1570
  %1572 = vmatmul.bf16.gmra.mxu0 %v965
  %v1573 = vpop.f32.mrf.mxu0
  %v1574 = vadd.f32 %v1525, %v1573
  %v1575 = vpop.f32.mrf.mxu0
  %v1576 = vadd.f32 %v1527, %v1575
  %1577 = vmatmul.bf16.gmra.mxu0 %v973
  %v1578 = vpop.f32.mrf.mxu0
  %v1579 = vadd.f32 %v1530, %v1578
  %v1580 = vpop.f32.mrf.mxu0
  %v1581 = vadd.f32 %v1532, %v1580
  %1582 = vmatmul.bf16.gmra.mxu0 %v981
  %v1583 = vpop.f32.mrf.mxu0
  %v1584 = vadd.f32 %v1535, %v1583
  %v1585 = vpop.f32.mrf.mxu0
  %v1586 = vadd.f32 %v1537, %v1585
  %1587 = vmatmul.bf16.gmra.mxu0 %v989
  %v1588 = vpop.f32.mrf.mxu0
  %v1589 = vadd.f32 %v1540, %v1588
  %v1590 = vpop.f32.mrf.mxu0
  %v1591 = vadd.f32 %v1542, %v1590
  %1592 = vmatmul.bf16.gmra.mxu0 %v997
  %v1593 = vpop.f32.mrf.mxu0
  %v1594 = vadd.f32 %v1545, %v1593
  %v1595 = vpop.f32.mrf.mxu0
  %v1596 = vadd.f32 %v1547, %v1595
  %1597 = vdwg.mxu0
  %1598 = vmatpush.bf16.msra.mxu0 %v1354
  %1599 = vmatpush.bf16.msra.mxu0 %v1353
  %1600 = vmatpush.bf16.msra.mxu0 %v1352
  %1601 = vmatpush.bf16.msra.mxu0 %v1351
  %1602 = vmatpush.bf16.msra.mxu0 %v1350
  %1603 = vmatpush.bf16.msra.mxu0 %v1349
  %1604 = vmatpush.bf16.msra.mxu0 %v1348
  %1605 = vmatpush.bf16.msra.mxu0 %v1347
  %1606 = vmatmul.bf16.gmra.mxu0 %v942
  %v1607 = vpop.f32.mrf.mxu0
  %v1608 = vadd.f32 %v1559, %v1607
  %v1609 = vpop.f32.mrf.mxu0
  %v1610 = vadd.f32 %v1561, %v1609
  %1611 = vmatmul.bf16.gmra.mxu0 %v950
  %v1612 = vpop.f32.mrf.mxu0
  %v1613 = vadd.f32 %v1564, %v1612
  %v1614 = vpop.f32.mrf.mxu0
  %v1615 = vadd.f32 %v1566, %v1614
  %1616 = vmatmul.bf16.gmra.mxu0 %v958
  %v1617 = vpop.f32.mrf.mxu0
  %v1618 = vadd.f32 %v1569, %v1617
  %v1619 = vpop.f32.mrf.mxu0
  %v1620 = vadd.f32 %v1571, %v1619
  %1621 = vmatmul.bf16.gmra.mxu0 %v966
  %v1622 = vpop.f32.mrf.mxu0
  %v1623 = vadd.f32 %v1574, %v1622
  %v1624 = vpop.f32.mrf.mxu0
  %v1625 = vadd.f32 %v1576, %v1624
  %1626 = vmatmul.bf16.gmra.mxu0 %v974
  %v1627 = vpop.f32.mrf.mxu0
  %v1628 = vadd.f32 %v1579, %v1627
  %v1629 = vpop.f32.mrf.mxu0
  %v1630 = vadd.f32 %v1581, %v1629
  %1631 = vmatmul.bf16.gmra.mxu0 %v982
  %v1632 = vpop.f32.mrf.mxu0
  %v1633 = vadd.f32 %v1584, %v1632
  %v1634 = vpop.f32.mrf.mxu0
  %v1635 = vadd.f32 %v1586, %v1634
  %1636 = vmatmul.bf16.gmra.mxu0 %v990
  %v1637 = vpop.f32.mrf.mxu0
  %v1638 = vadd.f32 %v1589, %v1637
  %v1639 = vpop.f32.mrf.mxu0
  %v1640 = vadd.f32 %v1591, %v1639
  %1641 = vmatmul.bf16.gmra.mxu0 %v998
  %v1642 = vpop.f32.mrf.mxu0
  %v1643 = vadd.f32 %v1594, %v1642
  %v1644 = vpop.f32.mrf.mxu0
  %v1645 = vadd.f32 %v1596, %v1644
  %1646 = vdwg.mxu0
  %1647 = vmatpush.bf16.msra.mxu0 %v1362
  %1648 = vmatpush.bf16.msra.mxu0 %v1361
  %1649 = vmatpush.bf16.msra.mxu0 %v1360
  %1650 = vmatpush.bf16.msra.mxu0 %v1359
  %1651 = vmatpush.bf16.msra.mxu0 %v1358
  %1652 = vmatpush.bf16.msra.mxu0 %v1357
  %1653 = vmatpush.bf16.msra.mxu0 %v1356
  %1654 = vmatpush.bf16.msra.mxu0 %v1355
  %1655 = vmatmul.bf16.gmra.mxu0 %v943
  %v1656 = vpop.f32.mrf.mxu0
  %v1657 = vadd.f32 %v1608, %v1656
  %v1658 = vpop.f32.mrf.mxu0
  %v1659 = vadd.f32 %v1610, %v1658
  %1660 = vmatmul.bf16.gmra.mxu0 %v951
  %v1661 = vpop.f32.mrf.mxu0
  %v1662 = vadd.f32 %v1613, %v1661
  %v1663 = vpop.f32.mrf.mxu0
  %v1664 = vadd.f32 %v1615, %v1663
  %1665 = vmatmul.bf16.gmra.mxu0 %v959
  %v1666 = vpop.f32.mrf.mxu0
  %v1667 = vadd.f32 %v1618, %v1666
  %v1668 = vpop.f32.mrf.mxu0
  %v1669 = vadd.f32 %v1620, %v1668
  %1670 = vmatmul.bf16.gmra.mxu0 %v967
  %v1671 = vpop.f32.mrf.mxu0
  %v1672 = vadd.f32 %v1623, %v1671
  %v1673 = vpop.f32.mrf.mxu0
  %v1674 = vadd.f32 %v1625, %v1673
  %1675 = vmatmul.bf16.gmra.mxu0 %v975
  %v1676 = vpop.f32.mrf.mxu0
  %v1677 = vadd.f32 %v1628, %v1676
  %v1678 = vpop.f32.mrf.mxu0
  %v1679 = vadd.f32 %v1630, %v1678
  %1680 = vmatmul.bf16.gmra.mxu0 %v983
  %v1681 = vpop.f32.mrf.mxu0
  %v1682 = vadd.f32 %v1633, %v1681
  %v1683 = vpop.f32.mrf.mxu0
  %v1684 = vadd.f32 %v1635, %v1683
  %1685 = vmatmul.bf16.gmra.mxu0 %v991
  %v1686 = vpop.f32.mrf.mxu0
  %v1687 = vadd.f32 %v1638, %v1686
  %v1688 = vpop.f32.mrf.mxu0
  %v1689 = vadd.f32 %v1640, %v1688
  %1690 = vmatmul.bf16.gmra.mxu0 %v999
  %v1691 = vpop.f32.mrf.mxu0
  %v1692 = vadd.f32 %v1643, %v1691
  %v1693 = vpop.f32.mrf.mxu0
  %v1694 = vadd.f32 %v1645, %v1693
  %1695 = vdwg.mxu0
  %1696 = vmatpush.bf16.msra.mxu0 %v1370
  %1697 = vmatpush.bf16.msra.mxu0 %v1369
  %1698 = vmatpush.bf16.msra.mxu0 %v1368
  %1699 = vmatpush.bf16.msra.mxu0 %v1367
  %1700 = vmatpush.bf16.msra.mxu0 %v1366
  %1701 = vmatpush.bf16.msra.mxu0 %v1365
  %1702 = vmatpush.bf16.msra.mxu0 %v1364
  %1703 = vmatpush.bf16.msra.mxu0 %v1363
  %1704 = vmatmul.bf16.gmra.mxu0 %v944
  %v1705 = vpop.f32.mrf.mxu0
  %v1706 = vadd.f32 %v1657, %v1705
  %v1707 = vpop.f32.mrf.mxu0
  %v1708 = vadd.f32 %v1659, %v1707
  %1709 = vmatmul.bf16.gmra.mxu0 %v952
  %v1710 = vpop.f32.mrf.mxu0
  %v1711 = vadd.f32 %v1662, %v1710
  %v1712 = vpop.f32.mrf.mxu0
  %v1713 = vadd.f32 %v1664, %v1712
  %1714 = vmatmul.bf16.gmra.mxu0 %v960
  %v1715 = vpop.f32.mrf.mxu0
  %v1716 = vadd.f32 %v1667, %v1715
  %v1717 = vpop.f32.mrf.mxu0
  %v1718 = vadd.f32 %v1669, %v1717
  %1719 = vmatmul.bf16.gmra.mxu0 %v968
  %v1720 = vpop.f32.mrf.mxu0
  %v1721 = vadd.f32 %v1672, %v1720
  %v1722 = vpop.f32.mrf.mxu0
  %v1723 = vadd.f32 %v1674, %v1722
  %1724 = vmatmul.bf16.gmra.mxu0 %v976
  %v1725 = vpop.f32.mrf.mxu0
  %v1726 = vadd.f32 %v1677, %v1725
  %v1727 = vpop.f32.mrf.mxu0
  %v1728 = vadd.f32 %v1679, %v1727
  %1729 = vmatmul.bf16.gmra.mxu0 %v984
  %v1730 = vpop.f32.mrf.mxu0
  %v1731 = vadd.f32 %v1682, %v1730
  %v1732 = vpop.f32.mrf.mxu0
  %v1733 = vadd.f32 %v1684, %v1732
  %1734 = vmatmul.bf16.gmra.mxu0 %v992
  %v1735 = vpop.f32.mrf.mxu0
  %v1736 = vadd.f32 %v1687, %v1735
  %v1737 = vpop.f32.mrf.mxu0
  %v1738 = vadd.f32 %v1689, %v1737
  %1739 = vmatmul.bf16.gmra.mxu0 %v1000
  %v1740 = vpop.f32.mrf.mxu0
  %v1741 = vadd.f32 %v1692, %v1740
  %v1742 = vpop.f32.mrf.mxu0
  %v1743 = vadd.f32 %v1694, %v1742
  %1744 = vdwg.mxu0
  %1745 = vmatpush.bf16.msra.mxu0 %v1378
  %1746 = vmatpush.bf16.msra.mxu0 %v1377
  %1747 = vmatpush.bf16.msra.mxu0 %v1376
  %1748 = vmatpush.bf16.msra.mxu0 %v1375
  %1749 = vmatpush.bf16.msra.mxu0 %v1374
  %1750 = vmatpush.bf16.msra.mxu0 %v1373
  %1751 = vmatpush.bf16.msra.mxu0 %v1372
  %1752 = vmatpush.bf16.msra.mxu0 %v1371
  %1753 = vmatmul.bf16.gmra.mxu0 %v945
  %v1754 = vpop.f32.mrf.mxu0
  %v1755 = vadd.f32 %v1706, %v1754
  %v1756 = vpop.f32.mrf.mxu0
  %v1757 = vadd.f32 %v1708, %v1756
  %1758 = vmatmul.bf16.gmra.mxu0 %v953
  %v1759 = vpop.f32.mrf.mxu0
  %v1760 = vadd.f32 %v1711, %v1759
  %v1761 = vpop.f32.mrf.mxu0
  %v1762 = vadd.f32 %v1713, %v1761
  %1763 = vmatmul.bf16.gmra.mxu0 %v961
  %v1764 = vpop.f32.mrf.mxu0
  %v1765 = vadd.f32 %v1716, %v1764
  %v1766 = vpop.f32.mrf.mxu0
  %v1767 = vadd.f32 %v1718, %v1766
  %1768 = vmatmul.bf16.gmra.mxu0 %v969
  %v1769 = vpop.f32.mrf.mxu0
  %v1770 = vadd.f32 %v1721, %v1769
  %v1771 = vpop.f32.mrf.mxu0
  %v1772 = vadd.f32 %v1723, %v1771
  %1773 = vmatmul.bf16.gmra.mxu0 %v977
  %v1774 = vpop.f32.mrf.mxu0
  %v1775 = vadd.f32 %v1726, %v1774
  %v1776 = vpop.f32.mrf.mxu0
  %v1777 = vadd.f32 %v1728, %v1776
  %1778 = vmatmul.bf16.gmra.mxu0 %v985
  %v1779 = vpop.f32.mrf.mxu0
  %v1780 = vadd.f32 %v1731, %v1779
  %v1781 = vpop.f32.mrf.mxu0
  %v1782 = vadd.f32 %v1733, %v1781
  %1783 = vmatmul.bf16.gmra.mxu0 %v993
  %v1784 = vpop.f32.mrf.mxu0
  %v1785 = vadd.f32 %v1736, %v1784
  %v1786 = vpop.f32.mrf.mxu0
  %v1787 = vadd.f32 %v1738, %v1786
  %1788 = vmatmul.bf16.gmra.mxu0 %v1001
  %v1789 = vpop.f32.mrf.mxu0
  %v1790 = vadd.f32 %v1741, %v1789
  %v1791 = vpop.f32.mrf.mxu0
  %v1792 = vadd.f32 %v1743, %v1791
  %1793 = vdwg.mxu0
  %1794 = vmatpush.bf16.msra.mxu0 %v1386
  %1795 = vmatpush.bf16.msra.mxu0 %v1385
  %1796 = vmatpush.bf16.msra.mxu0 %v1384
  %1797 = vmatpush.bf16.msra.mxu0 %v1383
  %1798 = vmatpush.bf16.msra.mxu0 %v1382
  %1799 = vmatpush.bf16.msra.mxu0 %v1381
  %1800 = vmatpush.bf16.msra.mxu0 %v1380
  %1801 = vmatpush.bf16.msra.mxu0 %v1379
  %1802 = vmatmul.bf16.gmra.mxu0 %v946
  %v1803 = vpop.f32.mrf.mxu0
  %v1804 = vadd.f32 %v1755, %v1803
  %v1805 = vpop.f32.mrf.mxu0
  %v1806 = vadd.f32 %v1757, %v1805
  %1807 = vmatmul.bf16.gmra.mxu0 %v954
  %v1808 = vpop.f32.mrf.mxu0
  %v1809 = vadd.f32 %v1760, %v1808
  %v1810 = vpop.f32.mrf.mxu0
  %v1811 = vadd.f32 %v1762, %v1810
  %1812 = vmatmul.bf16.gmra.mxu0 %v962
  %v1813 = vpop.f32.mrf.mxu0
  %v1814 = vadd.f32 %v1765, %v1813
  %v1815 = vpop.f32.mrf.mxu0
  %v1816 = vadd.f32 %v1767, %v1815
  %1817 = vmatmul.bf16.gmra.mxu0 %v970
  %v1818 = vpop.f32.mrf.mxu0
  %v1819 = vadd.f32 %v1770, %v1818
  %v1820 = vpop.f32.mrf.mxu0
  %v1821 = vadd.f32 %v1772, %v1820
  %1822 = vmatmul.bf16.gmra.mxu0 %v978
  %v1823 = vpop.f32.mrf.mxu0
  %v1824 = vadd.f32 %v1775, %v1823
  %v1825 = vpop.f32.mrf.mxu0
  %v1826 = vadd.f32 %v1777, %v1825
  %1827 = vmatmul.bf16.gmra.mxu0 %v986
  %v1828 = vpop.f32.mrf.mxu0
  %v1829 = vadd.f32 %v1780, %v1828
  %v1830 = vpop.f32.mrf.mxu0
  %v1831 = vadd.f32 %v1782, %v1830
  %1832 = vmatmul.bf16.gmra.mxu0 %v994
  %v1833 = vpop.f32.mrf.mxu0
  %v1834 = vadd.f32 %v1785, %v1833
  %v1835 = vpop.f32.mrf.mxu0
  %v1836 = vadd.f32 %v1787, %v1835
  %1837 = vmatmul.bf16.gmra.mxu0 %v1002
  %v1838 = vpop.f32.mrf.mxu0
  %v1839 = vadd.f32 %v1790, %v1838
  %v1840 = vpop.f32.mrf.mxu0
  %v1841 = vadd.f32 %v1792, %v1840
  %1842 = vdwg.mxu0
  %1843 = vst [vmem:[%s7 + $0x10] sm:$0xff] %v1804
  %1844 = vst [vmem:[%s7 + $0x28] sm:$0xff] %v1806
  %1845 = vst [vmem:[%s7 + $0x40] sm:$0xff] %v1809
  %1846 = vst [vmem:[%s7 + $0x58] sm:$0xff] %v1811
  %1847 = vst [vmem:[%s7 + $0x70] sm:$0xff] %v1814
  %1848 = vst [vmem:[%s7 + $0x88] sm:$0xff] %v1816
  %1849 = vst [vmem:[%s7 + $0xa0] sm:$0xff] %v1819
  %1850 = vst [vmem:[%s7 + $0xb8] sm:$0xff] %v1821
  %1851 = vst [vmem:[%s7 + $0xd0] sm:$0xff] %v1824
  %1852 = vst [vmem:[%s7 + $0xe8] sm:$0xff] %v1826
  %1853 = vst [vmem:[%s7 + $0x100] sm:$0xff] %v1829
  %1854 = vst [vmem:[%s7 + $0x118] sm:$0xff] %v1831
  %1855 = vst [vmem:[%s7 + $0x130] sm:$0xff] %v1834
  %1856 = vst [vmem:[%s7 + $0x148] sm:$0xff] %v1836
  %1857 = vst [vmem:[%s7 + $0x160] sm:$0xff] %v1839
  %1858 = vst [vmem:[%s7 + $0x178] sm:$0xff] %v1841
  // Predicated region
  $region30: #{cross_embed_forward.1} parent=0 // pred_check
    _
  $region31: #{cross_embed_forward.1} parent=0 // pred_check_branch
    %1860 = sbr.rel (0) target = $region33
  $region32: #{cross_embed_forward.1} parent=0 // pred_region
    _
  $region33: #{cross_embed_forward.1} parent=0 // pred_fallthru
    _
  // Predicated region
  $region34: #{cross_embed_forward.1} parent=0 // pred_check
    _
  $region35: #{cross_embed_forward.1} parent=0 // pred_check_branch
    %1862 = sbr.rel (0) target = $region37
  $region36: #{cross_embed_forward.1} parent=0 // pred_region
    _
  $region37: #{cross_embed_forward.1} parent=0 // pred_fallthru
    _

</llo_original>
